<compile_context>
chip_gen: v7x
topology: tpu7x:2x2x1
jax: 0.10.0
libtpu: 0.0.40
codegen_flags: <defaults>
</compile_context>

<pallas_src>
import functools

import jax
import jax.numpy as jnp
from jax import lax
from jax.experimental import pallas as pl
from jax.experimental.pallas import tpu as pltpu

LEAK = 0.1  # LeakyReLU negative slope


def _lrelu(v):
    # leaky_relu(v) == max(v, slope*v) for 0 < slope < 1
    return jnp.maximum(v, LEAK * v)


def _halo(ksize, W):
    """Flat halo size and 128-aligned interior offset for the padded scratch."""
    P = (ksize - 1) // 2
    padf = P * W + P
    off = ((padf + 127) // 128) * 128 if padf else 0
    return padf, off


# --------------------------------------------------------------------------
# Degradation branch (dynamic-kernel generator MLP + CA attention MLP).
# Four tiny (B, 64) matmuls -> plain JAX in the wrapper.
# --------------------------------------------------------------------------
def deg_branch(d, params, ksize):
    HI = lax.Precision.HIGHEST
    h = _lrelu(jnp.dot(d, params["wk1_t"], precision=HI))
    kflat = jnp.dot(h, params["wk2_t"], precision=HI)             # (B, 64*k*k)
    kern = kflat.reshape(d.shape[0], 64, ksize * ksize)           # free reshape
    g = _lrelu(jnp.dot(d, params["wca1_t"], precision=HI))
    att = jax.nn.sigmoid(jnp.dot(g, params["wca2_t"], precision=HI))   # (B, 64)
    return kern, att


# --------------------------------------------------------------------------
# Main kernel: per batch element, fused
#   dynamic kxk depthwise conv -> LeakyReLU -> 1x1 conv (+bias) -> + x*att
# on a lane-dense (C, H*W) layout.
# --------------------------------------------------------------------------
def da_conv_kernel(ksize, H, W, x_ref, kern_ref, w11_ref, b11_ref, att_ref,
                   cmask_ref, out_ref, zbuf_ref):
    P = (ksize - 1) // 2
    N = H * W
    PADF, OFF = _halo(ksize, W)
    C = x_ref.shape[1]

    # Halo-padded flat copy of this image in VMEM scratch:
    #   zbuf[:, OFF + n] = x[:, n], zero halo (>= PADF lanes) on both sides.
    if OFF:
        zeros = jnp.zeros((C, OFF), jnp.float32)
        zbuf_ref[:, 0:OFF] = zeros
        zbuf_ref[:, OFF + N:OFF + N + OFF] = zeros
    zbuf_ref[:, OFF:OFF + N] = x_ref[0]

    kern = kern_ref[0]                        # (C, k*k) per-(b, c) dynamic taps

    # Dynamic depthwise conv: k*k statically shifted lane slices of zbuf,
    # multiply-accumulated on the VPU. Row out-of-range taps read the zero
    # halo; column out-of-range taps are zeroed by the precomputed masks.
    base = OFF - PADF
    acc = None
    for i in range(ksize):
        for j in range(ksize):
            o = base + i * W + j
            tap = zbuf_ref[:, o:o + N]                       # (C, N)
            t = i * ksize + j
            contrib = tap * kern[:, t:t + 1]                 # (C,1) lane bcast
            if j != P:
                contrib = contrib * cmask_ref[j:j + 1, :]    # (1,N) sublane bcast
            acc = contrib if acc is None else acc + contrib
    acc = _lrelu(acc)                                        # self.relu

    # 1x1 conv as one MXU matmul (C_out, C) @ (C, N), plus bias.
    y = jnp.dot(w11_ref[...], acc, preferred_element_type=jnp.float32)
    y = y + b11_ref[...]

    # CA residual: x * att  (att was already passed through sigmoid).
    out_ref[0] = y + x_ref[0] * att_ref[0]


def da_conv_forward(x, d, params, ksize):
    B, C, H, W = x.shape
    N = H * W
    P = (ksize - 1) // 2
    _, OFF = _halo(ksize, W)
    C_out = params["w_conv"].shape[0]

    # degradation branch (plain JAX, tiny)
    kern, att = deg_branch(d, params, ksize)              # (B,C,k*k), (B,C_out)

    # lane-dense working layout: spatial flattened onto the lane dimension
    x_flat = x.reshape(B, C, N)                           # metadata-only reshape
    att3 = att.reshape(B, C_out, 1)
    bias = params["b_conv"].reshape(C_out, 1)

    # column-boundary validity masks (1.0 where the shifted tap stays inside
    # the image row, 0.0 where it would wrap to the previous/next row)
    col = jnp.arange(N, dtype=jnp.int32) % W
    offs = jnp.arange(ksize, dtype=jnp.int32)[:, None] - P
    cmask = ((col[None, :] + offs >= 0) &
             (col[None, :] + offs < W)).astype(jnp.float32)     # (ksize, N)

    out_flat = pl.pallas_call(
        functools.partial(da_conv_kernel, ksize, H, W),
        out_shape=jax.ShapeDtypeStruct((B, C_out, N), jnp.float32),
        grid=(B,),
        in_specs=[
            pl.BlockSpec((1, C, N), lambda b: (b, 0, 0)),              # x (lane-dense)
            pl.BlockSpec((1, C, ksize * ksize), lambda b: (b, 0, 0)),  # dyn. kernels
            pl.BlockSpec((C_out, C), lambda b: (0, 0)),                # 1x1 weight
            pl.BlockSpec((C_out, 1), lambda b: (0, 0)),                # 1x1 bias
            pl.BlockSpec((1, C_out, 1), lambda b: (b, 0, 0)),          # CA attention
            pl.BlockSpec((ksize, N), lambda b: (0, 0)),                # column masks
        ],
        out_specs=pl.BlockSpec((1, C_out, N), lambda b: (b, 0, 0)),    # lane-dense out
        scratch_shapes=[pltpu.VMEM((C, N + 2 * OFF), jnp.float32)],
        compiler_params=pltpu.CompilerParams(
            dimension_semantics=("parallel",)),     # >=2 steps for v7x's 2 TCs
    )(x_flat, kern, params["w_conv"], bias, att3, cmask)

    # (B, C_out, H*W) -> NCHW: free reshape in the wrapper
    return out_flat.reshape(B, C_out, H, W)


# --------------------------------------------------------------------------
# Pure-JAX reference (mirrors the PyTorch forward) for a correctness check
# --------------------------------------------------------------------------
def da_conv_reference(x, d, params, ksize):
    B, C, H, W = x.shape
    P = (ksize - 1) // 2
    HI = lax.Precision.HIGHEST

    h = _lrelu(jnp.dot(d, params["wk1_t"], precision=HI))
    kflat = jnp.dot(h, params["wk2_t"], precision=HI)
    kern = kflat.reshape(B * 64, 1, ksize, ksize)

    dw = lax.conv_general_dilated(
        x.reshape(1, B * C, H, W), kern,
        window_strides=(1, 1), padding=((P, P), (P, P)),
        dimension_numbers=("NCHW", "OIHW", "NCHW"),
        feature_group_count=B * C, precision=HI)
    dw = _lrelu(dw).reshape(B, C, H, W)

    out = jnp.einsum("oc,bchw->bohw", params["w_conv"], dw, precision=HI)
    out = out + params["b_conv"][None, :, None, None]

    g = _lrelu(jnp.dot(d, params["wca1_t"], precision=HI))
    att = jax.nn.sigmoid(jnp.dot(g, params["wca2_t"], precision=HI))
    out = out + x * att[:, :, None, None]
    return out


if __name__ == "__main__":
    key = jax.random.PRNGKey(0)
    # channels are fixed at 64 by the module's hard-coded Linear(64, ...);
    # H=W=16 gives a lane-dense 256-wide working layout.
    B, C, H, W = 2, 64, 16, 16
    C_out = 64
    ksize, reduction = 3, 8

    ks = jax.random.split(key, 8)
    x = jax.random.normal(ks[0], (B, C, H, W), jnp.float32)      # x[0] feature map
    d = jax.random.normal(ks[1], (B, 64), jnp.float32)           # x[1] degradation rep

    s = 0.1  # deterministic synthetic parameters (weights stored pre-transposed: (in, out))
    params = dict(
        wk1_t=s * jax.random.normal(ks[2], (64, 64), jnp.float32),
        wk2_t=s * jax.random.normal(ks[3], (64, 64 * ksize * ksize), jnp.float32),
        wca1_t=s * jax.random.normal(ks[4], (64, 64 // reduction), jnp.float32),
        wca2_t=s * jax.random.normal(ks[5], (64 // reduction, 64), jnp.float32),
        w_conv=s * jax.random.normal(ks[6], (C_out, C), jnp.float32),   # 1x1 conv weight
        b_conv=s * jax.random.normal(ks[7], (C_out,), jnp.float32),     # 1x1 conv bias
    )

    out = jax.block_until_ready(da_conv_forward(x, d, params, ksize))
    ref = jax.block_until_ready(da_conv_reference(x, d, params, ksize))

    assert out.shape == (B, C_out, H, W)
    max_err = float(jnp.max(jnp.abs(out - ref)))
    assert jnp.allclose(out, ref, rtol=1e-3, atol=1e-3), f"max_err={max_err}"
    print("KERNEL_OK")
</pallas_src>

<mosaic_0001>
module attributes {stable_mosaic.version = 11 : i64} {
  func.func @da_conv_kernel(%arg0: i32, %arg1: memref<1x64x256xf32, #tpu.memory_space<vmem>>, %arg2: memref<1x64x9xf32, #tpu.memory_space<vmem>>, %arg3: memref<64x64xf32, #tpu.memory_space<vmem>>, %arg4: memref<64x1xf32, #tpu.memory_space<vmem>>, %arg5: memref<1x64x1xf32, #tpu.memory_space<vmem>>, %arg6: memref<3x256xf32, #tpu.memory_space<vmem>>, %arg7: memref<1x64x256xf32, #tpu.memory_space<vmem>>, %arg8: memref<64x512xf32, #tpu.memory_space<vmem>>) attributes {dimension_semantics = [#tpu.dimension_semantics<parallel>], iteration_bounds = array<i64: 2>, scalar_prefetch = 0 : i64, scratch_operands = 1 : i64, tpu.core_type = #tpu.core_type<tc>, window_params = [{transform_indices = @transform_0, window_bounds = array<i64: 1, 64, 256>}, {transform_indices = @transform_1, window_bounds = array<i64: 1, 64, 9>}, {pipeline_mode = #tpu.pipeline_mode<synchronous>, transform_indices = @transform_2, window_bounds = array<i64: 64, 64>}, {pipeline_mode = #tpu.pipeline_mode<synchronous>, transform_indices = @transform_3, window_bounds = array<i64: 64, 1>}, {transform_indices = @transform_4, window_bounds = array<i64: 1, 64, 1>}, {pipeline_mode = #tpu.pipeline_mode<synchronous>, transform_indices = @transform_5, window_bounds = array<i64: 3, 256>}, {transform_indices = @transform_6, window_bounds = array<i64: 1, 64, 256>}]} {
    %cst = arith.constant 0.000000e+00 : f32
    %0 = vector.broadcast %cst : f32 to vector<64x128xf32>
    %c0 = arith.constant 0 : index
    %c0_0 = arith.constant 0 : index
    %1 = vector.load %arg8[%c0, %c0_0] : memref<64x512xf32, #tpu.memory_space<vmem>>, vector<64x128xf32>
    tpu.vector_store %arg8[%c0, %c0_0], %0 {strides = array<i32>} : memref<64x512xf32, #tpu.memory_space<vmem>>, vector<64x128xf32>,
    %c0_1 = arith.constant 0 : index
    %c384 = arith.constant 384 : index
    %2 = vector.load %arg8[%c0_1, %c384] : memref<64x512xf32, #tpu.memory_space<vmem>>, vector<64x128xf32>
    tpu.vector_store %arg8[%c0_1, %c384], %0 {strides = array<i32>} : memref<64x512xf32, #tpu.memory_space<vmem>>, vector<64x128xf32>,
    %c0_2 = arith.constant 0 : index
    %c0_3 = arith.constant 0 : index
    %c0_4 = arith.constant 0 : index
    %3 = vector.load %arg1[%c0_2, %c0_3, %c0_4] : memref<1x64x256xf32, #tpu.memory_space<vmem>>, vector<1x64x256xf32>
    %4 = vector.shape_cast %3 : vector<1x64x256xf32> to vector<64x256xf32>
    %c0_5 = arith.constant 0 : index
    %c128 = arith.constant 128 : index
    %5 = vector.load %arg8[%c0_5, %c128] : memref<64x512xf32, #tpu.memory_space<vmem>>, vector<64x256xf32>
    tpu.vector_store %arg8[%c0_5, %c128], %4 {strides = array<i32>} : memref<64x512xf32, #tpu.memory_space<vmem>>, vector<64x256xf32>,
    %c0_6 = arith.constant 0 : index
    %c0_7 = arith.constant 0 : index
    %c0_8 = arith.constant 0 : index
    %6 = vector.load %arg2[%c0_6, %c0_7, %c0_8] : memref<1x64x9xf32, #tpu.memory_space<vmem>>, vector<1x64x9xf32>
    %7 = vector.shape_cast %6 : vector<1x64x9xf32> to vector<64x9xf32>
    %c0_9 = arith.constant 0 : index
    %c111 = arith.constant 111 : index
    %8 = vector.load %arg8[%c0_9, %c111] : memref<64x512xf32, #tpu.memory_space<vmem>>, vector<64x256xf32>
    %9 = vector.extract_strided_slice %7 {offsets = [0, 0], sizes = [64, 1], strides = [1, 1]} : vector<64x9xf32> to vector<64x1xf32>
    %10 = vector.broadcast %9 : vector<64x1xf32> to vector<64x256xf32>
    %11 = arith.mulf %8, %10 : vector<64x256xf32>
    %c0_10 = arith.constant 0 : index
    %c0_11 = arith.constant 0 : index
    %12 = vector.load %arg6[%c0_10, %c0_11] : memref<3x256xf32, #tpu.memory_space<vmem>>, vector<1x256xf32>
    %13 = vector.broadcast %12 : vector<1x256xf32> to vector<64x256xf32>
    %14 = arith.mulf %11, %13 : vector<64x256xf32>
    %c0_12 = arith.constant 0 : index
    %c112 = arith.constant 112 : index
    %15 = vector.load %arg8[%c0_12, %c112] : memref<64x512xf32, #tpu.memory_space<vmem>>, vector<64x256xf32>
    %16 = vector.extract_strided_slice %7 {offsets = [0, 1], sizes = [64, 1], strides = [1, 1]} : vector<64x9xf32> to vector<64x1xf32>
    %17 = vector.broadcast %16 : vector<64x1xf32> to vector<64x256xf32>
    %18 = arith.mulf %15, %17 : vector<64x256xf32>
    %19 = arith.addf %14, %18 : vector<64x256xf32>
    %c0_13 = arith.constant 0 : index
    %c113 = arith.constant 113 : index
    %20 = vector.load %arg8[%c0_13, %c113] : memref<64x512xf32, #tpu.memory_space<vmem>>, vector<64x256xf32>
    %21 = vector.extract_strided_slice %7 {offsets = [0, 2], sizes = [64, 1], strides = [1, 1]} : vector<64x9xf32> to vector<64x1xf32>
    %22 = vector.broadcast %21 : vector<64x1xf32> to vector<64x256xf32>
    %23 = arith.mulf %20, %22 : vector<64x256xf32>
    %c2 = arith.constant 2 : index
    %c0_14 = arith.constant 0 : index
    %24 = vector.load %arg6[%c2, %c0_14] : memref<3x256xf32, #tpu.memory_space<vmem>>, vector<1x256xf32>
    %25 = vector.broadcast %24 : vector<1x256xf32> to vector<64x256xf32>
    %26 = arith.mulf %23, %25 : vector<64x256xf32>
    %27 = arith.addf %19, %26 : vector<64x256xf32>
    %c0_15 = arith.constant 0 : index
    %c127 = arith.constant 127 : index
    %28 = vector.load %arg8[%c0_15, %c127] : memref<64x512xf32, #tpu.memory_space<vmem>>, vector<64x256xf32>
    %29 = vector.extract_strided_slice %7 {offsets = [0, 3], sizes = [64, 1], strides = [1, 1]} : vector<64x9xf32> to vector<64x1xf32>
    %30 = vector.broadcast %29 : vector<64x1xf32> to vector<64x256xf32>
    %31 = arith.mulf %28, %30 : vector<64x256xf32>
    %c0_16 = arith.constant 0 : index
    %c0_17 = arith.constant 0 : index
    %32 = vector.load %arg6[%c0_16, %c0_17] : memref<3x256xf32, #tpu.memory_space<vmem>>, vector<1x256xf32>
    %33 = vector.broadcast %32 : vector<1x256xf32> to vector<64x256xf32>
    %34 = arith.mulf %31, %33 : vector<64x256xf32>
    %35 = arith.addf %27, %34 : vector<64x256xf32>
    %c0_18 = arith.constant 0 : index
    %c128_19 = arith.constant 128 : index
    %36 = vector.load %arg8[%c0_18, %c128_19] : memref<64x512xf32, #tpu.memory_space<vmem>>, vector<64x256xf32>
    %37 = vector.extract_strided_slice %7 {offsets = [0, 4], sizes = [64, 1], strides = [1, 1]} : vector<64x9xf32> to vector<64x1xf32>
    %38 = vector.broadcast %37 : vector<64x1xf32> to vector<64x256xf32>
    %39 = arith.mulf %36, %38 : vector<64x256xf32>
    %40 = arith.addf %35, %39 : vector<64x256xf32>
    %c0_20 = arith.constant 0 : index
    %c129 = arith.constant 129 : index
    %41 = vector.load %arg8[%c0_20, %c129] : memref<64x512xf32, #tpu.memory_space<vmem>>, vector<64x256xf32>
    %42 = vector.extract_strided_slice %7 {offsets = [0, 5], sizes = [64, 1], strides = [1, 1]} : vector<64x9xf32> to vector<64x1xf32>
    %43 = vector.broadcast %42 : vector<64x1xf32> to vector<64x256xf32>
    %44 = arith.mulf %41, %43 : vector<64x256xf32>
    %c2_21 = arith.constant 2 : index
    %c0_22 = arith.constant 0 : index
    %45 = vector.load %arg6[%c2_21, %c0_22] : memref<3x256xf32, #tpu.memory_space<vmem>>, vector<1x256xf32>
    %46 = vector.broadcast %45 : vector<1x256xf32> to vector<64x256xf32>
    %47 = arith.mulf %44, %46 : vector<64x256xf32>
    %48 = arith.addf %40, %47 : vector<64x256xf32>
    %c0_23 = arith.constant 0 : index
    %c143 = arith.constant 143 : index
    %49 = vector.load %arg8[%c0_23, %c143] : memref<64x512xf32, #tpu.memory_space<vmem>>, vector<64x256xf32>
    %50 = vector.extract_strided_slice %7 {offsets = [0, 6], sizes = [64, 1], strides = [1, 1]} : vector<64x9xf32> to vector<64x1xf32>
    %51 = vector.broadcast %50 : vector<64x1xf32> to vector<64x256xf32>
    %52 = arith.mulf %49, %51 : vector<64x256xf32>
    %c0_24 = arith.constant 0 : index
    %c0_25 = arith.constant 0 : index
    %53 = vector.load %arg6[%c0_24, %c0_25] : memref<3x256xf32, #tpu.memory_space<vmem>>, vector<1x256xf32>
    %54 = vector.broadcast %53 : vector<1x256xf32> to vector<64x256xf32>
    %55 = arith.mulf %52, %54 : vector<64x256xf32>
    %56 = arith.addf %48, %55 : vector<64x256xf32>
    %c0_26 = arith.constant 0 : index
    %c144 = arith.constant 144 : index
    %57 = vector.load %arg8[%c0_26, %c144] : memref<64x512xf32, #tpu.memory_space<vmem>>, vector<64x256xf32>
    %58 = vector.extract_strided_slice %7 {offsets = [0, 7], sizes = [64, 1], strides = [1, 1]} : vector<64x9xf32> to vector<64x1xf32>
    %59 = vector.broadcast %58 : vector<64x1xf32> to vector<64x256xf32>
    %60 = arith.mulf %57, %59 : vector<64x256xf32>
    %61 = arith.addf %56, %60 : vector<64x256xf32>
    %c0_27 = arith.constant 0 : index
    %c145 = arith.constant 145 : index
    %62 = vector.load %arg8[%c0_27, %c145] : memref<64x512xf32, #tpu.memory_space<vmem>>, vector<64x256xf32>
    %63 = vector.extract_strided_slice %7 {offsets = [0, 8], sizes = [64, 1], strides = [1, 1]} : vector<64x9xf32> to vector<64x1xf32>
    %64 = vector.broadcast %63 : vector<64x1xf32> to vector<64x256xf32>
    %65 = arith.mulf %62, %64 : vector<64x256xf32>
    %c2_28 = arith.constant 2 : index
    %c0_29 = arith.constant 0 : index
    %66 = vector.load %arg6[%c2_28, %c0_29] : memref<3x256xf32, #tpu.memory_space<vmem>>, vector<1x256xf32>
    %67 = vector.broadcast %66 : vector<1x256xf32> to vector<64x256xf32>
    %68 = arith.mulf %65, %67 : vector<64x256xf32>
    %69 = arith.addf %61, %68 : vector<64x256xf32>
    %cst_30 = arith.constant 1.000000e-01 : f32
    %70 = vector.broadcast %cst_30 : f32 to vector<64x256xf32>
    %71 = arith.mulf %70, %69 : vector<64x256xf32>
    %72 = arith.maximumf %69, %71 : vector<64x256xf32>
    %c0_31 = arith.constant 0 : index
    %c0_32 = arith.constant 0 : index
    %73 = vector.load %arg3[%c0_31, %c0_32] : memref<64x64xf32, #tpu.memory_space<vmem>>, vector<64x64xf32>
    %cst_33 = arith.constant dense<0.000000e+00> : vector<64x256xf32>
    %74 = tpu.matmul %73, %72, %cst_33 {dimension_numbers = #tpu.dot_dimension_numbers<[1], [0], [0], [1], [0, 0, 1, 1], [], []>} : vector<64x64xf32>, vector<64x256xf32>, vector<64x256xf32> -> vector<64x256xf32>
    %c0_34 = arith.constant 0 : index
    %c0_35 = arith.constant 0 : index
    %75 = vector.load %arg4[%c0_34, %c0_35] : memref<64x1xf32, #tpu.memory_space<vmem>>, vector<64x1xf32>
    %76 = vector.broadcast %75 : vector<64x1xf32> to vector<64x256xf32>
    %77 = arith.addf %74, %76 : vector<64x256xf32>
    %c0_36 = arith.constant 0 : index
    %c0_37 = arith.constant 0 : index
    %c0_38 = arith.constant 0 : index
    %78 = vector.load %arg1[%c0_36, %c0_37, %c0_38] : memref<1x64x256xf32, #tpu.memory_space<vmem>>, vector<1x64x256xf32>
    %79 = vector.shape_cast %78 : vector<1x64x256xf32> to vector<64x256xf32>
    %c0_39 = arith.constant 0 : index
    %c0_40 = arith.constant 0 : index
    %c0_41 = arith.constant 0 : index
    %80 = vector.load %arg5[%c0_39, %c0_40, %c0_41] : memref<1x64x1xf32, #tpu.memory_space<vmem>>, vector<1x64x1xf32>
    %81 = vector.shape_cast %80 : vector<1x64x1xf32> to vector<64x1xf32>
    %82 = vector.broadcast %81 : vector<64x1xf32> to vector<64x256xf32>
    %83 = arith.mulf %79, %82 : vector<64x256xf32>
    %84 = arith.addf %77, %83 : vector<64x256xf32>
    %c0_42 = arith.constant 0 : index
    %c0_43 = arith.constant 0 : index
    %c0_44 = arith.constant 0 : index
    %85 = vector.load %arg7[%c0_42, %c0_43, %c0_44] : memref<1x64x256xf32, #tpu.memory_space<vmem>>, vector<1x64x256xf32>
    %86 = vector.shape_cast %85 : vector<1x64x256xf32> to vector<64x256xf32>
    %87 = vector.shape_cast %84 : vector<64x256xf32> to vector<1x64x256xf32>
    tpu.vector_store %arg7[%c0_42, %c0_43, %c0_44], %87 {strides = array<i32>} : memref<1x64x256xf32, #tpu.memory_space<vmem>>, vector<1x64x256xf32>,
    return
  }
  func.func @transform_0(%arg0: i32) -> (i32, i32, i32) {
    %c0_i32 = arith.constant 0 : i32
    %c0_i32_0 = arith.constant 0 : i32
    %c0_i32_1 = arith.constant 0 : i32
    return %arg0, %c0_i32, %c0_i32_0 : i32, i32, i32
  }
  func.func @transform_1(%arg0: i32) -> (i32, i32, i32) {
    %c0_i32 = arith.constant 0 : i32
    %c0_i32_0 = arith.constant 0 : i32
    %c0_i32_1 = arith.constant 0 : i32
    return %arg0, %c0_i32, %c0_i32_0 : i32, i32, i32
  }
  func.func @transform_2(%arg0: i32) -> (i32, i32) {
    %c0_i32 = arith.constant 0 : i32
    %c0_i32_0 = arith.constant 0 : i32
    %c0_i32_1 = arith.constant 0 : i32
    return %c0_i32, %c0_i32_0 : i32, i32
  }
  func.func @transform_3(%arg0: i32) -> (i32, i32) {
    %c0_i32 = arith.constant 0 : i32
    %c0_i32_0 = arith.constant 0 : i32
    %c0_i32_1 = arith.constant 0 : i32
    return %c0_i32, %c0_i32_0 : i32, i32
  }
  func.func @transform_4(%arg0: i32) -> (i32, i32, i32) {
    %c0_i32 = arith.constant 0 : i32
    %c0_i32_0 = arith.constant 0 : i32
    %c0_i32_1 = arith.constant 0 : i32
    return %arg0, %c0_i32, %c0_i32_0 : i32, i32, i32
  }
  func.func @transform_5(%arg0: i32) -> (i32, i32) {
    %c0_i32 = arith.constant 0 : i32
    %c0_i32_0 = arith.constant 0 : i32
    %c0_i32_1 = arith.constant 0 : i32
    return %c0_i32, %c0_i32_0 : i32, i32
  }
  func.func @transform_6(%arg0: i32) -> (i32, i32, i32) {
    %c0_i32 = arith.constant 0 : i32
    %c0_i32_0 = arith.constant 0 : i32
    %c0_i32_1 = arith.constant 0 : i32
    return %arg0, %c0_i32, %c0_i32_0 : i32, i32, i32
  }
}

</mosaic_0001>

<llo_original>
// kernel: tpu_custom_call.1
$region0: #{tpu_custom_call.1}
  #allocation0 [shape = 'u32[]', space=smem, size = 0x4, offset = 0x4, fixed_abs, tag = 'smem constant byte address 0x4 - core index']
  #allocation1 [shape = 'u32[144,128]{1,0:T(1,128)}', space=vmem, size = 0x12000, scoped, tag = 'internal scratch']
  #allocation2 [shape = 'f32[64,512]{1,0:T(8,128)}', space=vmem, size = 0x20000, scoped, tag = 'scratch operand']
  %s0 = inlined_call_operand.vmem [shape: f32[2,64,256], index: 0, kind: input, shape index: {}]
  %s1 = inlined_call_operand.vmem [shape: f32[2,64,9], index: 1, kind: input, shape index: {}]
  %s2 = inlined_call_operand.vmem [shape: f32[64,64], index: 2, kind: input, shape index: {}]
  %s3 = inlined_call_operand.vmem [shape: f32[64,1], index: 3, kind: input, shape index: {}]
  %s4 = inlined_call_operand.vmem [shape: f32[2,64,1], index: 4, kind: input, shape index: {}]
  %s5 = inlined_call_operand.vmem [shape: f32[3,256], index: 5, kind: input, shape index: {}]
  %s6 = inlined_call_operand.hbm [shape: f32[2,64,256], index: 6, kind: output, shape index: {}]
  %s7 = sld [smem:[#allocation0]]
  $region57: #{tpu_custom_call.1} parent=0
    _
  %s9 = ssub.s32 1, %s7
  %s10 = scalar_select 0, %s9, %s7
  $region1: #{tpu_custom_call.1} parent=0
    #allocation3 [shape = 'u8[131072]{0}', space=vmem, size = 0x20000, scoped, tag = 'output window, operand 0']
    #allocation4 [shape = 's32[2]{0}', space=sflag, size = 0x8, scoped, tag = 'scoped memory for tpu_custom_call.1']
    %11 = vsyncpa [#allocation4], 0
    %s12 = scalar_lea.sflag [#allocation4], 1
    %13 = vsyncpa %s12, 0
    loop: start=0, step=1, limit=4
    $region2: #{tpu_custom_call.1} parent=1 // loop_pre_header
      _
    $region3: #{tpu_custom_call.1} parent=1 // loop_header
      %s15 = sphi 0, %s19
      %p16 = scmp.ge.s32.totalorder %s15, 4
      %s25 = sphi 0, %s27
      %s28 = sphi 0, %s25
      %s29 = sphi 0, %s28
      %s45 = sphi 0, %s29
      %s51 = sphi 0, %s53
      %s54 = sphi 0, %s51
      %s55 = sphi 0, %s54
      %s71 = sphi 0, %s55
      %s75 = sphi 0, %s75
      %s77 = sphi 0, %s75
      %s78 = sphi 0, %s77
      %s92 = sphi 0, %s78
      %s96 = sphi 0, %s96
      %s98 = sphi 0, %s96
      %s99 = sphi 0, %s98
      %s113 = sphi 0, %s99
      %s119 = sphi 0, %s121
      %s122 = sphi 0, %s119
      %s123 = sphi 0, %s122
      %s139 = sphi 0, %s123
      %s143 = sphi 0, %s143
      %s145 = sphi 0, %s143
      %s146 = sphi 0, %s145
      %s160 = sphi 0, %s146
      %s166 = sphi 0, %s168
      %s169 = sphi 0, %s166
      %s170 = sphi 0, %s169
      %s186 = sphi 0, %s170
    $region4: #{tpu_custom_call.1} parent=1 // loop_header_branch
      %18 = sbr.rel (%p16) target = $region8
    $region5: #{tpu_custom_call.1} parent=1 // loop_body
      %s20 = ssub.s32 %s15, 1
      %s21 = ssub.s32 %s15, 2
      %s22 = sadd.s32 %s15, 1
      %s23 = ssub.s32 %s15, %s22
      %p24 = scmp.eq.s32.totalorder %s23, 0
      %s26 = sadd.s32 %s25, 1
      %s27 = scalar_select %p24, %s25, %s26
      %p30 = pneg %p24
      %p31 = scmp.eq.s32.totalorder %s15, 1
      %p32 = por %p30, %p31
      %p33 = scmp.ne.s32.totalorder %s25, %s28
      %p34 = scmp.eq.s32.totalorder %s15, 0
      %p35 = por %p33, %p34
      %p36 = scmp.ne.s32.totalorder %s25, %s28
      %p37 = scmp.eq.s32.totalorder %s20, 1
      %p38 = por %p36, %p37
      %p39 = scmp.ne.s32.totalorder %s28, %s29
      %p40 = scmp.eq.s32.totalorder %s20, 0
      %p41 = por %p39, %p40
      %p42 = scmp.ne.s32.totalorder %s28, %s29
      %p43 = scmp.eq.s32.totalorder %s21, 1
      %p44 = por %p42, %p43
      %p46 = scmp.ne.s32.totalorder %s29, %s45
      %p47 = scmp.eq.s32.totalorder %s21, 0
      %p48 = por %p46, %p47
      %s49 = ssub.s32 %s15, %s22
      %p50 = scmp.eq.s32.totalorder %s49, 0
      %s52 = sadd.s32 %s51, 1
      %s53 = scalar_select %p50, %s51, %s52
      %p56 = pneg %p50
      %p57 = scmp.eq.s32.totalorder %s15, 1
      %p58 = por %p56, %p57
      %p59 = scmp.ne.s32.totalorder %s51, %s54
      %p60 = scmp.eq.s32.totalorder %s15, 0
      %p61 = por %p59, %p60
      %p62 = scmp.ne.s32.totalorder %s51, %s54
      %p63 = scmp.eq.s32.totalorder %s20, 1
      %p64 = por %p62, %p63
      %p65 = scmp.ne.s32.totalorder %s54, %s55
      %p66 = scmp.eq.s32.totalorder %s20, 0
      %p67 = por %p65, %p66
      %p68 = scmp.ne.s32.totalorder %s54, %s55
      %p69 = scmp.eq.s32.totalorder %s21, 1
      %p70 = por %p68, %p69
      %p72 = scmp.ne.s32.totalorder %s55, %s71
      %p73 = scmp.eq.s32.totalorder %s21, 0
      %p74 = por %p72, %p73
      %s76 = sadd.s32 %s75, 1
      %p79 = scmp.eq.s32.totalorder %s15, 1
      %p80 = scmp.ne.s32.totalorder %s75, %s77
      %p81 = scmp.eq.s32.totalorder %s15, 0
      %p82 = por %p80, %p81
      %p83 = scmp.ne.s32.totalorder %s75, %s77
      %p84 = scmp.eq.s32.totalorder %s20, 1
      %p85 = por %p83, %p84
      %p86 = scmp.ne.s32.totalorder %s77, %s78
      %p87 = scmp.eq.s32.totalorder %s20, 0
      %p88 = por %p86, %p87
      %p89 = scmp.ne.s32.totalorder %s77, %s78
      %p90 = scmp.eq.s32.totalorder %s21, 1
      %p91 = por %p89, %p90
      %p93 = scmp.ne.s32.totalorder %s78, %s92
      %p94 = scmp.eq.s32.totalorder %s21, 0
      %p95 = por %p93, %p94
      %s97 = sadd.s32 %s96, 1
      %p100 = scmp.eq.s32.totalorder %s15, 1
      %p101 = scmp.ne.s32.totalorder %s96, %s98
      %p102 = scmp.eq.s32.totalorder %s15, 0
      %p103 = por %p101, %p102
      %p104 = scmp.ne.s32.totalorder %s96, %s98
      %p105 = scmp.eq.s32.totalorder %s20, 1
      %p106 = por %p104, %p105
      %p107 = scmp.ne.s32.totalorder %s98, %s99
      %p108 = scmp.eq.s32.totalorder %s20, 0
      %p109 = por %p107, %p108
      %p110 = scmp.ne.s32.totalorder %s98, %s99
      %p111 = scmp.eq.s32.totalorder %s21, 1
      %p112 = por %p110, %p111
      %p114 = scmp.ne.s32.totalorder %s99, %s113
      %p115 = scmp.eq.s32.totalorder %s21, 0
      %p116 = por %p114, %p115
      %s117 = ssub.s32 %s15, %s22
      %p118 = scmp.eq.s32.totalorder %s117, 0
      %s120 = sadd.s32 %s119, 1
      %s121 = scalar_select %p118, %s119, %s120
      %p124 = pneg %p118
      %p125 = scmp.eq.s32.totalorder %s15, 1
      %p126 = por %p124, %p125
      %p127 = scmp.ne.s32.totalorder %s119, %s122
      %p128 = scmp.eq.s32.totalorder %s15, 0
      %p129 = por %p127, %p128
      %p130 = scmp.ne.s32.totalorder %s119, %s122
      %p131 = scmp.eq.s32.totalorder %s20, 1
      %p132 = por %p130, %p131
      %p133 = scmp.ne.s32.totalorder %s122, %s123
      %p134 = scmp.eq.s32.totalorder %s20, 0
      %p135 = por %p133, %p134
      %p136 = scmp.ne.s32.totalorder %s122, %s123
      %p137 = scmp.eq.s32.totalorder %s21, 1
      %p138 = por %p136, %p137
      %p140 = scmp.ne.s32.totalorder %s123, %s139
      %p141 = scmp.eq.s32.totalorder %s21, 0
      %p142 = por %p140, %p141
      %s144 = sadd.s32 %s143, 1
      %p147 = scmp.eq.s32.totalorder %s15, 1
      %p148 = scmp.ne.s32.totalorder %s143, %s145
      %p149 = scmp.eq.s32.totalorder %s15, 0
      %p150 = por %p148, %p149
      %p151 = scmp.ne.s32.totalorder %s143, %s145
      %p152 = scmp.eq.s32.totalorder %s20, 1
      %p153 = por %p151, %p152
      %p154 = scmp.ne.s32.totalorder %s145, %s146
      %p155 = scmp.eq.s32.totalorder %s20, 0
      %p156 = por %p154, %p155
      %p157 = scmp.ne.s32.totalorder %s145, %s146
      %p158 = scmp.eq.s32.totalorder %s21, 1
      %p159 = por %p157, %p158
      %p161 = scmp.ne.s32.totalorder %s146, %s160
      %p162 = scmp.eq.s32.totalorder %s21, 0
      %p163 = por %p161, %p162
      %s164 = ssub.s32 %s15, %s22
      %p165 = scmp.eq.s32.totalorder %s164, 0
      %s167 = sadd.s32 %s166, 1
      %s168 = scalar_select %p165, %s166, %s167
      %p171 = pneg %p165
      %p172 = scmp.eq.s32.totalorder %s15, 1
      %p173 = por %p171, %p172
      %p174 = scmp.ne.s32.totalorder %s166, %s169
      %p175 = scmp.eq.s32.totalorder %s15, 0
      %p176 = por %p174, %p175
      %p177 = scmp.ne.s32.totalorder %s166, %s169
      %p178 = scmp.eq.s32.totalorder %s20, 1
      %p179 = por %p177, %p178
      %p180 = scmp.ne.s32.totalorder %s169, %s170
      %p181 = scmp.eq.s32.totalorder %s20, 0
      %p182 = por %p180, %p181
      %p183 = scmp.ne.s32.totalorder %s169, %s170
      %p184 = scmp.eq.s32.totalorder %s21, 1
      %p185 = por %p183, %p184
      %p187 = scmp.ne.s32.totalorder %s170, %s186
      %p188 = scmp.eq.s32.totalorder %s21, 0
      %p189 = por %p187, %p188
      %p190 = scmp.le.s32.totalorder 1, %s15
      %p191 = scmp.lt.s32.totalorder %s15, 3
      %p192 = pnand %p190, %p191
      %p193 = pneg %p192
      // Predicated region
      $region9: #{tpu_custom_call.1} parent=5 // pred_check
        _
      $region10: #{tpu_custom_call.1} parent=5 // pred_check_branch
        %195 = sbr.rel (%p192) target = $region12
      $region11: #{tpu_custom_call.1} parent=5 // pred_region
        %s196 = ssub.s32 %s15, 1
        // Predicated region
        $region13: #{tpu_custom_call.1} parent=11 // pred_check
          %p197 = pneg %p88
        $region14: #{tpu_custom_call.1} parent=11 // pred_check_branch
          %199 = sbr.rel (%p197) target = $region16
        $region15: #{tpu_custom_call.1} parent=11 // pred_region
          _
        $region16: #{tpu_custom_call.1} parent=11 // pred_fallthru
          _
        // Predicated region
        $region17: #{tpu_custom_call.1} parent=11 // pred_check
          %p200 = pneg %p109
        $region18: #{tpu_custom_call.1} parent=11 // pred_check_branch
          %202 = sbr.rel (%p200) target = $region20
        $region19: #{tpu_custom_call.1} parent=11 // pred_region
          _
        $region20: #{tpu_custom_call.1} parent=11 // pred_fallthru
          _
        // Predicated region
        $region21: #{tpu_custom_call.1} parent=11 // pred_check
          %p203 = pneg %p156
        $region22: #{tpu_custom_call.1} parent=11 // pred_check_branch
          %205 = sbr.rel (%p203) target = $region24
        $region23: #{tpu_custom_call.1} parent=11 // pred_region
          _
        $region24: #{tpu_custom_call.1} parent=11 // pred_fallthru
          _
      $region12: #{tpu_custom_call.1} parent=5 // pred_fallthru
        _
      %p206 = scmp.lt.s32.totalorder %s15, 2
      // Predicated region
      $region25: #{tpu_custom_call.1} parent=5 // pred_check
        %p207 = pneg %p206
      $region26: #{tpu_custom_call.1} parent=5 // pred_check_branch
        %209 = sbr.rel (%p207) target = $region28
      $region27: #{tpu_custom_call.1} parent=5 // pred_region
        // Predicated region
        $region29: #{tpu_custom_call.1} parent=27 // pred_check
          %p210 = pneg %p35
        $region30: #{tpu_custom_call.1} parent=27 // pred_check_branch
          %212 = sbr.rel (%p210) target = $region32
        $region31: #{tpu_custom_call.1} parent=27 // pred_region
          %p213 = scmp.lt.s32.totalorder %s15, 1
          %s214 = scalar_select %p213, %s15, 1
          %s215 = smul.addr %s214, 16
          %s216 = smul.addr %s215, 8
          %s217 = scalar_lea.vmem %s0, %s216
        $region32: #{tpu_custom_call.1} parent=27 // pred_fallthru
          _
        // Predicated region
        $region33: #{tpu_custom_call.1} parent=27 // pred_check
          %p218 = pneg %p61
        $region34: #{tpu_custom_call.1} parent=27 // pred_check_branch
          %220 = sbr.rel (%p218) target = $region36
        $region35: #{tpu_custom_call.1} parent=27 // pred_region
          %p221 = scmp.lt.s32.totalorder %s15, 1
          %s222 = scalar_select %p221, %s15, 1
          %s223 = smul.addr %s222, 8
          %s224 = smul.addr %s223, 8
          %s225 = scalar_lea.vmem %s1, %s224
        $region36: #{tpu_custom_call.1} parent=27 // pred_fallthru
          _
        // Predicated region
        $region37: #{tpu_custom_call.1} parent=27 // pred_check
          %p226 = pneg %p129
        $region38: #{tpu_custom_call.1} parent=27 // pred_check_branch
          %228 = sbr.rel (%p226) target = $region40
        $region39: #{tpu_custom_call.1} parent=27 // pred_region
          %p229 = scmp.lt.s32.totalorder %s15, 1
          %s230 = scalar_select %p229, %s15, 1
          %s231 = smul.addr %s230, 8
          %s232 = smul.addr %s231, 8
          %s233 = scalar_lea.vmem %s4, %s232
        $region40: #{tpu_custom_call.1} parent=27 // pred_fallthru
          _
      $region28: #{tpu_custom_call.1} parent=5 // pred_fallthru
        _
      %p234 = scmp.le.s32.totalorder 1, %s15
      %p235 = scmp.lt.s32.totalorder %s15, 3
      %p236 = pnand %p234, %p235
      %p237 = pneg %p236
      // Predicated region
      $region41: #{tpu_custom_call.1} parent=5 // pred_check
        _
      $region42: #{tpu_custom_call.1} parent=5 // pred_check_branch
        %239 = sbr.rel (%p236) target = $region44
      $region43: #{tpu_custom_call.1} parent=5 // pred_region
        %s240 = ssub.s32 %s15, 1
        %p241 = scmp.lt.s32.totalorder %s20, 1
        %s242 = scalar_select %p241, %s20, 1
        %s243 = smul.addr %s242, 16
        %s244 = smul.addr %s243, 8
        %s245 = scalar_lea.vmem %s0, %s244
        %p246 = pneg %p41
        %p247 = pneg %p38
        %p248 = scmp.lt.s32.totalorder %s20, 1
        %s249 = scalar_select %p248, %s20, 1
        %s250 = smul.addr %s249, 8
        %s251 = smul.addr %s250, 8
        %s252 = scalar_lea.vmem %s1, %s251
        %p253 = pneg %p67
        %p254 = pneg %p64
        %p255 = pneg %p88
        %p256 = pneg %p85
        %p257 = pneg %p109
        %p258 = pneg %p106
        %p259 = scmp.lt.s32.totalorder %s20, 1
        %s260 = scalar_select %p259, %s20, 1
        %s261 = smul.addr %s260, 8
        %s262 = smul.addr %s261, 8
        %s263 = scalar_lea.vmem %s4, %s262
        %p264 = pneg %p135
        %p265 = pneg %p132
        %p266 = pneg %p156
        %p267 = pneg %p153
        %p268 = pneg %p182
        %p269 = pneg %p179
        %s270 = sand.u32 %s169, 1
        %s271 = scalar_lea.sflag [#allocation4], %s270
        %s272 = sand.u32 %s169, 1
        %s273 = smul.addr %s272, 128
        %s274 = scalar_lea.vmem [#allocation3], %s273
        %p275 = scmp.lt.s32.totalorder %s20, 1
        %s276 = scalar_select %p275, %s20, 1
        %s277 = smul.addr %s276, 16
        %s278 = smul.addr %s277, 8
        %s279 = scalar_lea.vmem %s0, %s278
        %p280 = scmp.lt.s32.totalorder %s20, 1
        %s281 = scalar_select %p280, %s20, 1
        %s282 = smul.addr %s281, 8
        %s283 = smul.addr %s282, 8
        %s284 = scalar_lea.vmem %s1, %s283
        %p285 = scmp.lt.s32.totalorder %s20, 1
        %s286 = scalar_select %p285, %s20, 1
        %s287 = smul.addr %s286, 8
        %s288 = smul.addr %s287, 8
        %s289 = scalar_lea.vmem %s4, %s288
        %290 = vst [vmem:[#allocation2] sm:$0xff] 0.0
        %291 = vst [vmem:[#allocation2 + $0x20] sm:$0xff] 0.0
        %292 = vst [vmem:[#allocation2 + $0x40] sm:$0xff] 0.0
        %293 = vst [vmem:[#allocation2 + $0x60] sm:$0xff] 0.0
        %294 = vst [vmem:[#allocation2 + $0x80] sm:$0xff] 0.0
        %295 = vst [vmem:[#allocation2 + $0xa0] sm:$0xff] 0.0
        %296 = vst [vmem:[#allocation2 + $0xc0] sm:$0xff] 0.0
        %297 = vst [vmem:[#allocation2 + $0xe0] sm:$0xff] 0.0
        %298 = vst [vmem:[#allocation2 + $0x18] sm:$0xff] 0.0
        %299 = vst [vmem:[#allocation2 + $0x38] sm:$0xff] 0.0
        %300 = vst [vmem:[#allocation2 + $0x58] sm:$0xff] 0.0
        %301 = vst [vmem:[#allocation2 + $0x78] sm:$0xff] 0.0
        %302 = vst [vmem:[#allocation2 + $0x98] sm:$0xff] 0.0
        %303 = vst [vmem:[#allocation2 + $0xb8] sm:$0xff] 0.0
        %304 = vst [vmem:[#allocation2 + $0xd8] sm:$0xff] 0.0
        %305 = vst [vmem:[#allocation2 + $0xf8] sm:$0xff] 0.0
        %v306 = vld [vmem:[%s279] sm:$0xff]
        %v307 = vld [vmem:[%s279 + $0x8] sm:$0xff]
        %v308 = vld [vmem:[%s279 + $0x10] sm:$0xff]
        %v309 = vld [vmem:[%s279 + $0x18] sm:$0xff]
        %v310 = vld [vmem:[%s279 + $0x20] sm:$0xff]
        %v311 = vld [vmem:[%s279 + $0x28] sm:$0xff]
        %v312 = vld [vmem:[%s279 + $0x30] sm:$0xff]
        %v313 = vld [vmem:[%s279 + $0x38] sm:$0xff]
        %v314 = vld [vmem:[%s279 + $0x40] sm:$0xff]
        %v315 = vld [vmem:[%s279 + $0x48] sm:$0xff]
        %v316 = vld [vmem:[%s279 + $0x50] sm:$0xff]
        %v317 = vld [vmem:[%s279 + $0x58] sm:$0xff]
        %v318 = vld [vmem:[%s279 + $0x60] sm:$0xff]
        %v319 = vld [vmem:[%s279 + $0x68] sm:$0xff]
        %v320 = vld [vmem:[%s279 + $0x70] sm:$0xff]
        %v321 = vld [vmem:[%s279 + $0x78] sm:$0xff]
        %322 = vst [vmem:[#allocation2 + $0x8] sm:$0xff] %v306
        %323 = vst [vmem:[#allocation2 + $0x10] sm:$0xff] %v307
        %324 = vst [vmem:[#allocation2 + $0x28] sm:$0xff] %v308
        %325 = vst [vmem:[#allocation2 + $0x30] sm:$0xff] %v309
        %326 = vst [vmem:[#allocation2 + $0x48] sm:$0xff] %v310
        %327 = vst [vmem:[#allocation2 + $0x50] sm:$0xff] %v311
        %328 = vst [vmem:[#allocation2 + $0x68] sm:$0xff] %v312
        %329 = vst [vmem:[#allocation2 + $0x70] sm:$0xff] %v313
        %330 = vst [vmem:[#allocation2 + $0x88] sm:$0xff] %v314
        %331 = vst [vmem:[#allocation2 + $0x90] sm:$0xff] %v315
        %332 = vst [vmem:[#allocation2 + $0xa8] sm:$0xff] %v316
        %333 = vst [vmem:[#allocation2 + $0xb0] sm:$0xff] %v317
        %334 = vst [vmem:[#allocation2 + $0xc8] sm:$0xff] %v318
        %335 = vst [vmem:[#allocation2 + $0xd0] sm:$0xff] %v319
        %336 = vst [vmem:[#allocation2 + $0xe8] sm:$0xff] %v320
        %337 = vst [vmem:[#allocation2 + $0xf0] sm:$0xff] %v321
        %v338 = vld [vmem:[%s284] sm:$0xff]
        %v339 = vld [vmem:[%s284 + $0x8] sm:$0xff]
        %v340 = vld [vmem:[%s284 + $0x10] sm:$0xff]
        %v341 = vld [vmem:[%s284 + $0x18] sm:$0xff]
        %v342 = vld [vmem:[%s284 + $0x20] sm:$0xff]
        %v343 = vld [vmem:[%s284 + $0x28] sm:$0xff]
        %v344 = vld [vmem:[%s284 + $0x30] sm:$0xff]
        %v345 = vld [vmem:[%s284 + $0x38] sm:$0xff]
        %v346 = vld [vmem:[#allocation2] sm:$0xff]
        %v347 = vld [vmem:[#allocation2 + $0x8] sm:$0xff]
        %v348 = vld [vmem:[#allocation2 + $0x10] sm:$0xff]
        %v349 = vld [vmem:[#allocation2 + $0x20] sm:$0xff]
        %v350 = vld [vmem:[#allocation2 + $0x28] sm:$0xff]
        %v351 = vld [vmem:[#allocation2 + $0x30] sm:$0xff]
        %v352 = vld [vmem:[#allocation2 + $0x40] sm:$0xff]
        %v353 = vld [vmem:[#allocation2 + $0x48] sm:$0xff]
        %v354 = vld [vmem:[#allocation2 + $0x50] sm:$0xff]
        %v355 = vld [vmem:[#allocation2 + $0x60] sm:$0xff]
        %v356 = vld [vmem:[#allocation2 + $0x68] sm:$0xff]
        %v357 = vld [vmem:[#allocation2 + $0x70] sm:$0xff]
        %v358 = vld [vmem:[#allocation2 + $0x80] sm:$0xff]
        %v359 = vld [vmem:[#allocation2 + $0x88] sm:$0xff]
        %v360 = vld [vmem:[#allocation2 + $0x90] sm:$0xff]
        %v361 = vld [vmem:[#allocation2 + $0xa0] sm:$0xff]
        %v362 = vld [vmem:[#allocation2 + $0xa8] sm:$0xff]
        %v363 = vld [vmem:[#allocation2 + $0xb0] sm:$0xff]
        %v364 = vld [vmem:[#allocation2 + $0xc0] sm:$0xff]
        %v365 = vld [vmem:[#allocation2 + $0xc8] sm:$0xff]
        %v366 = vld [vmem:[#allocation2 + $0xd0] sm:$0xff]
        %v367 = vld [vmem:[#allocation2 + $0xe0] sm:$0xff]
        %v368 = vld [vmem:[#allocation2 + $0xe8] sm:$0xff]
        %v369 = vld [vmem:[#allocation2 + $0xf0] sm:$0xff]
        %371 = vset.pattern.permute.xlu0 0
        %372 = vperm.xlu0 %371, %v338
        %v373 = vpop.permute.xlu0 %372
        %376 = vset.pattern.permute.xlu0 0
        %377 = vperm.xlu0 %376, %v339
        %v378 = vpop.permute.xlu0 %377
        %381 = vset.pattern.permute.xlu0 0
        %382 = vperm.xlu0 %381, %v340
        %v383 = vpop.permute.xlu0 %382
        %386 = vset.pattern.permute.xlu0 0
        %387 = vperm.xlu0 %386, %v341
        %v388 = vpop.permute.xlu0 %387
        %391 = vset.pattern.permute.xlu0 0
        %392 = vperm.xlu0 %391, %v342
        %v393 = vpop.permute.xlu0 %392
        %396 = vset.pattern.permute.xlu0 0
        %397 = vperm.xlu0 %396, %v343
        %v398 = vpop.permute.xlu0 %397
        %401 = vset.pattern.permute.xlu0 0
        %402 = vperm.xlu0 %401, %v344
        %v403 = vpop.permute.xlu0 %402
        %406 = vset.pattern.permute.xlu0 0
        %407 = vperm.xlu0 %406, %v345
        %v408 = vpop.permute.xlu0 %407
        %v410 = vmul.f32 %v346, %v373
        %v411 = vmul.f32 %v347, %v373
        %v412 = vmul.f32 %v348, %v373
        %v413 = vmul.f32 %v349, %v378
        %v414 = vmul.f32 %v350, %v378
        %v415 = vmul.f32 %v351, %v378
        %v416 = vmul.f32 %v352, %v383
        %v417 = vmul.f32 %v353, %v383
        %v418 = vmul.f32 %v354, %v383
        %v419 = vmul.f32 %v355, %v388
        %v420 = vmul.f32 %v356, %v388
        %v421 = vmul.f32 %v357, %v388
        %v422 = vmul.f32 %v358, %v393
        %v423 = vmul.f32 %v359, %v393
        %v424 = vmul.f32 %v360, %v393
        %v425 = vmul.f32 %v361, %v398
        %v426 = vmul.f32 %v362, %v398
        %v427 = vmul.f32 %v363, %v398
        %v428 = vmul.f32 %v364, %v403
        %v429 = vmul.f32 %v365, %v403
        %v430 = vmul.f32 %v366, %v403
        %v431 = vmul.f32 %v367, %v408
        %v432 = vmul.f32 %v368, %v408
        %v433 = vmul.f32 %v369, %v408
        %v434 = vld [vmem:[%s5] ss:$4 sm:$0x3]
        %v436 = vlaneseq
        %v437 = vshrl.u32 %v436, 7
        %v438 = vsub.s32 0, %v437
        %v439 = vrot.slane %v434, %v438
        %v440 = vlaneseq
        %v441 = vshrl.u32 %v440, 7
        %v442 = vsub.s32 1, %v441
        %v443 = vrot.slane %v434, %v442
        %444 = vrot.lane.b32.xlu0 %v439, 111
        %v445 = vpop.permute.xlu0 %444
        %446 = vrot.lane.b32.xlu0 %v443, 111
        %v447 = vpop.permute.xlu0 %446
        %vm448 = vcmask 908288
        %v449 = vsel %vm448, %v445, %v447
        %v453 = vmul.f32 %v410, %v445
        %v454 = vmul.f32 %v411, %v449
        %v455 = vmul.f32 %v412, %v447
        %v456 = vmul.f32 %v413, %v445
        %v457 = vmul.f32 %v414, %v449
        %v458 = vmul.f32 %v415, %v447
        %v459 = vmul.f32 %v416, %v445
        %v460 = vmul.f32 %v417, %v449
        %v461 = vmul.f32 %v418, %v447
        %v462 = vmul.f32 %v419, %v445
        %v463 = vmul.f32 %v420, %v449
        %v464 = vmul.f32 %v421, %v447
        %v465 = vmul.f32 %v422, %v445
        %v466 = vmul.f32 %v423, %v449
        %v467 = vmul.f32 %v424, %v447
        %v468 = vmul.f32 %v425, %v445
        %v469 = vmul.f32 %v426, %v449
        %v470 = vmul.f32 %v427, %v447
        %v471 = vmul.f32 %v428, %v445
        %v472 = vmul.f32 %v429, %v449
        %v473 = vmul.f32 %v430, %v447
        %v474 = vmul.f32 %v431, %v445
        %v475 = vmul.f32 %v432, %v449
        %v476 = vmul.f32 %v433, %v447
        %477 = vset.pattern.permute.xlu0 1
        %478 = vperm.xlu0 %477, %v338
        %v479 = vpop.permute.xlu0 %478
        %481 = vset.pattern.permute.xlu0 1
        %482 = vperm.xlu0 %481, %v339
        %v483 = vpop.permute.xlu0 %482
        %485 = vset.pattern.permute.xlu0 1
        %486 = vperm.xlu0 %485, %v340
        %v487 = vpop.permute.xlu0 %486
        %489 = vset.pattern.permute.xlu0 1
        %490 = vperm.xlu0 %489, %v341
        %v491 = vpop.permute.xlu0 %490
        %493 = vset.pattern.permute.xlu0 1
        %494 = vperm.xlu0 %493, %v342
        %v495 = vpop.permute.xlu0 %494
        %497 = vset.pattern.permute.xlu0 1
        %498 = vperm.xlu0 %497, %v343
        %v499 = vpop.permute.xlu0 %498
        %501 = vset.pattern.permute.xlu0 1
        %502 = vperm.xlu0 %501, %v344
        %v503 = vpop.permute.xlu0 %502
        %505 = vset.pattern.permute.xlu0 1
        %506 = vperm.xlu0 %505, %v345
        %v507 = vpop.permute.xlu0 %506
        %v509 = vmul.f32 %v346, %v479
        %v510 = vmul.f32 %v347, %v479
        %v511 = vmul.f32 %v348, %v479
        %v512 = vmul.f32 %v349, %v483
        %v513 = vmul.f32 %v350, %v483
        %v514 = vmul.f32 %v351, %v483
        %v515 = vmul.f32 %v352, %v487
        %v516 = vmul.f32 %v353, %v487
        %v517 = vmul.f32 %v354, %v487
        %v518 = vmul.f32 %v355, %v491
        %v519 = vmul.f32 %v356, %v491
        %v520 = vmul.f32 %v357, %v491
        %v521 = vmul.f32 %v358, %v495
        %v522 = vmul.f32 %v359, %v495
        %v523 = vmul.f32 %v360, %v495
        %v524 = vmul.f32 %v361, %v499
        %v525 = vmul.f32 %v362, %v499
        %v526 = vmul.f32 %v363, %v499
        %v527 = vmul.f32 %v364, %v503
        %v528 = vmul.f32 %v365, %v503
        %v529 = vmul.f32 %v366, %v503
        %v530 = vmul.f32 %v367, %v507
        %v531 = vmul.f32 %v368, %v507
        %v532 = vmul.f32 %v369, %v507
        %557 = vrot.lane.b32.xlu0 %v509, 127
        %v558 = vpop.permute.xlu0 %557
        %559 = vrot.lane.b32.xlu0 %v510, 127
        %v560 = vpop.permute.xlu0 %559
        %561 = vrot.lane.b32.xlu0 %v511, 127
        %v562 = vpop.permute.xlu0 %561
        %563 = vrot.lane.b32.xlu0 %v512, 127
        %v564 = vpop.permute.xlu0 %563
        %565 = vrot.lane.b32.xlu0 %v513, 127
        %v566 = vpop.permute.xlu0 %565
        %567 = vrot.lane.b32.xlu0 %v514, 127
        %v568 = vpop.permute.xlu0 %567
        %569 = vrot.lane.b32.xlu0 %v515, 127
        %v570 = vpop.permute.xlu0 %569
        %571 = vrot.lane.b32.xlu0 %v516, 127
        %v572 = vpop.permute.xlu0 %571
        %573 = vrot.lane.b32.xlu0 %v517, 127
        %v574 = vpop.permute.xlu0 %573
        %575 = vrot.lane.b32.xlu0 %v518, 127
        %v576 = vpop.permute.xlu0 %575
        %577 = vrot.lane.b32.xlu0 %v519, 127
        %v578 = vpop.permute.xlu0 %577
        %579 = vrot.lane.b32.xlu0 %v520, 127
        %v580 = vpop.permute.xlu0 %579
        %581 = vrot.lane.b32.xlu0 %v521, 127
        %v582 = vpop.permute.xlu0 %581
        %583 = vrot.lane.b32.xlu0 %v522, 127
        %v584 = vpop.permute.xlu0 %583
        %585 = vrot.lane.b32.xlu0 %v523, 127
        %v586 = vpop.permute.xlu0 %585
        %587 = vrot.lane.b32.xlu0 %v524, 127
        %v588 = vpop.permute.xlu0 %587
        %589 = vrot.lane.b32.xlu0 %v525, 127
        %v590 = vpop.permute.xlu0 %589
        %591 = vrot.lane.b32.xlu0 %v526, 127
        %v592 = vpop.permute.xlu0 %591
        %593 = vrot.lane.b32.xlu0 %v527, 127
        %v594 = vpop.permute.xlu0 %593
        %595 = vrot.lane.b32.xlu0 %v528, 127
        %v596 = vpop.permute.xlu0 %595
        %597 = vrot.lane.b32.xlu0 %v529, 127
        %v598 = vpop.permute.xlu0 %597
        %599 = vrot.lane.b32.xlu0 %v530, 127
        %v600 = vpop.permute.xlu0 %599
        %601 = vrot.lane.b32.xlu0 %v531, 127
        %v602 = vpop.permute.xlu0 %601
        %603 = vrot.lane.b32.xlu0 %v532, 127
        %v604 = vpop.permute.xlu0 %603
        %vm605 = vcmask 1039360
        %v606 = vsel %vm605, %v558, %v560
        %v607 = vsel %vm605, %v560, %v562
        %v608 = vsel %vm605, %v564, %v566
        %v609 = vsel %vm605, %v566, %v568
        %v610 = vsel %vm605, %v570, %v572
        %v611 = vsel %vm605, %v572, %v574
        %v612 = vsel %vm605, %v576, %v578
        %v613 = vsel %vm605, %v578, %v580
        %v614 = vsel %vm605, %v582, %v584
        %v615 = vsel %vm605, %v584, %v586
        %v616 = vsel %vm605, %v588, %v590
        %v617 = vsel %vm605, %v590, %v592
        %v618 = vsel %vm605, %v594, %v596
        %v619 = vsel %vm605, %v596, %v598
        %v620 = vsel %vm605, %v600, %v602
        %v621 = vsel %vm605, %v602, %v604
        %v646 = vadd.f32 %v453, %v606
        %v647 = vadd.f32 %v454, %v607
        %v648 = vadd.f32 %v455, %v562
        %v649 = vadd.f32 %v456, %v608
        %v650 = vadd.f32 %v457, %v609
        %v651 = vadd.f32 %v458, %v568
        %v652 = vadd.f32 %v459, %v610
        %v653 = vadd.f32 %v460, %v611
        %v654 = vadd.f32 %v461, %v574
        %v655 = vadd.f32 %v462, %v612
        %v656 = vadd.f32 %v463, %v613
        %v657 = vadd.f32 %v464, %v580
        %v658 = vadd.f32 %v465, %v614
        %v659 = vadd.f32 %v466, %v615
        %v660 = vadd.f32 %v467, %v586
        %v661 = vadd.f32 %v468, %v616
        %v662 = vadd.f32 %v469, %v617
        %v663 = vadd.f32 %v470, %v592
        %v664 = vadd.f32 %v471, %v618
        %v665 = vadd.f32 %v472, %v619
        %v666 = vadd.f32 %v473, %v598
        %v667 = vadd.f32 %v474, %v620
        %v668 = vadd.f32 %v475, %v621
        %v669 = vadd.f32 %v476, %v604
        %670 = vset.pattern.permute.xlu0 2
        %671 = vperm.xlu0 %670, %v338
        %v672 = vpop.permute.xlu0 %671
        %674 = vset.pattern.permute.xlu0 2
        %675 = vperm.xlu0 %674, %v339
        %v676 = vpop.permute.xlu0 %675
        %678 = vset.pattern.permute.xlu0 2
        %679 = vperm.xlu0 %678, %v340
        %v680 = vpop.permute.xlu0 %679
        %682 = vset.pattern.permute.xlu0 2
        %683 = vperm.xlu0 %682, %v341
        %v684 = vpop.permute.xlu0 %683
        %686 = vset.pattern.permute.xlu0 2
        %687 = vperm.xlu0 %686, %v342
        %v688 = vpop.permute.xlu0 %687
        %690 = vset.pattern.permute.xlu0 2
        %691 = vperm.xlu0 %690, %v343
        %v692 = vpop.permute.xlu0 %691
        %694 = vset.pattern.permute.xlu0 2
        %695 = vperm.xlu0 %694, %v344
        %v696 = vpop.permute.xlu0 %695
        %698 = vset.pattern.permute.xlu0 2
        %699 = vperm.xlu0 %698, %v345
        %v700 = vpop.permute.xlu0 %699
        %v702 = vmul.f32 %v346, %v672
        %v703 = vmul.f32 %v347, %v672
        %v704 = vmul.f32 %v348, %v672
        %v705 = vmul.f32 %v349, %v676
        %v706 = vmul.f32 %v350, %v676
        %v707 = vmul.f32 %v351, %v676
        %v708 = vmul.f32 %v352, %v680
        %v709 = vmul.f32 %v353, %v680
        %v710 = vmul.f32 %v354, %v680
        %v711 = vmul.f32 %v355, %v684
        %v712 = vmul.f32 %v356, %v684
        %v713 = vmul.f32 %v357, %v684
        %v714 = vmul.f32 %v358, %v688
        %v715 = vmul.f32 %v359, %v688
        %v716 = vmul.f32 %v360, %v688
        %v717 = vmul.f32 %v361, %v692
        %v718 = vmul.f32 %v362, %v692
        %v719 = vmul.f32 %v363, %v692
        %v720 = vmul.f32 %v364, %v696
        %v721 = vmul.f32 %v365, %v696
        %v722 = vmul.f32 %v366, %v696
        %v723 = vmul.f32 %v367, %v700
        %v724 = vmul.f32 %v368, %v700
        %v725 = vmul.f32 %v369, %v700
        %s726 = scalar_lea.vmem %s5, 2
        %v727 = vld [vmem:[%s726] ss:$4 sm:$0x3]
        %v729 = vlaneseq
        %v730 = vshrl.u32 %v729, 7
        %v731 = vsub.s32 0, %v730
        %v732 = vrot.slane %v727, %v731
        %v733 = vlaneseq
        %v734 = vshrl.u32 %v733, 7
        %v735 = vsub.s32 1, %v734
        %v736 = vrot.slane %v727, %v735
        %737 = vrot.lane.b32.xlu0 %v732, 113
        %v738 = vpop.permute.xlu0 %737
        %739 = vrot.lane.b32.xlu0 %v736, 113
        %v740 = vpop.permute.xlu0 %739
        %vm741 = vcmask 924672
        %v742 = vsel %vm741, %v738, %v740
        %v746 = vmul.f32 %v702, %v738
        %v747 = vmul.f32 %v703, %v742
        %v748 = vmul.f32 %v704, %v740
        %v749 = vmul.f32 %v705, %v738
        %v750 = vmul.f32 %v706, %v742
        %v751 = vmul.f32 %v707, %v740
        %v752 = vmul.f32 %v708, %v738
        %v753 = vmul.f32 %v709, %v742
        %v754 = vmul.f32 %v710, %v740
        %v755 = vmul.f32 %v711, %v738
        %v756 = vmul.f32 %v712, %v742
        %v757 = vmul.f32 %v713, %v740
        %v758 = vmul.f32 %v714, %v738
        %v759 = vmul.f32 %v715, %v742
        %v760 = vmul.f32 %v716, %v740
        %v761 = vmul.f32 %v717, %v738
        %v762 = vmul.f32 %v718, %v742
        %v763 = vmul.f32 %v719, %v740
        %v764 = vmul.f32 %v720, %v738
        %v765 = vmul.f32 %v721, %v742
        %v766 = vmul.f32 %v722, %v740
        %v767 = vmul.f32 %v723, %v738
        %v768 = vmul.f32 %v724, %v742
        %v769 = vmul.f32 %v725, %v740
        %794 = vrot.lane.b32.xlu0 %v746, 126
        %v795 = vpop.permute.xlu0 %794
        %796 = vrot.lane.b32.xlu0 %v747, 126
        %v797 = vpop.permute.xlu0 %796
        %798 = vrot.lane.b32.xlu0 %v748, 126
        %v799 = vpop.permute.xlu0 %798
        %800 = vrot.lane.b32.xlu0 %v749, 126
        %v801 = vpop.permute.xlu0 %800
        %802 = vrot.lane.b32.xlu0 %v750, 126
        %v803 = vpop.permute.xlu0 %802
        %804 = vrot.lane.b32.xlu0 %v751, 126
        %v805 = vpop.permute.xlu0 %804
        %806 = vrot.lane.b32.xlu0 %v752, 126
        %v807 = vpop.permute.xlu0 %806
        %808 = vrot.lane.b32.xlu0 %v753, 126
        %v809 = vpop.permute.xlu0 %808
        %810 = vrot.lane.b32.xlu0 %v754, 126
        %v811 = vpop.permute.xlu0 %810
        %812 = vrot.lane.b32.xlu0 %v755, 126
        %v813 = vpop.permute.xlu0 %812
        %814 = vrot.lane.b32.xlu0 %v756, 126
        %v815 = vpop.permute.xlu0 %814
        %816 = vrot.lane.b32.xlu0 %v757, 126
        %v817 = vpop.permute.xlu0 %816
        %818 = vrot.lane.b32.xlu0 %v758, 126
        %v819 = vpop.permute.xlu0 %818
        %820 = vrot.lane.b32.xlu0 %v759, 126
        %v821 = vpop.permute.xlu0 %820
        %822 = vrot.lane.b32.xlu0 %v760, 126
        %v823 = vpop.permute.xlu0 %822
        %824 = vrot.lane.b32.xlu0 %v761, 126
        %v825 = vpop.permute.xlu0 %824
        %826 = vrot.lane.b32.xlu0 %v762, 126
        %v827 = vpop.permute.xlu0 %826
        %828 = vrot.lane.b32.xlu0 %v763, 126
        %v829 = vpop.permute.xlu0 %828
        %830 = vrot.lane.b32.xlu0 %v764, 126
        %v831 = vpop.permute.xlu0 %830
        %832 = vrot.lane.b32.xlu0 %v765, 126
        %v833 = vpop.permute.xlu0 %832
        %834 = vrot.lane.b32.xlu0 %v766, 126
        %v835 = vpop.permute.xlu0 %834
        %836 = vrot.lane.b32.xlu0 %v767, 126
        %v837 = vpop.permute.xlu0 %836
        %838 = vrot.lane.b32.xlu0 %v768, 126
        %v839 = vpop.permute.xlu0 %838
        %840 = vrot.lane.b32.xlu0 %v769, 126
        %v841 = vpop.permute.xlu0 %840
        %vm842 = vcmask 1031168
        %v843 = vsel %vm842, %v795, %v797
        %v844 = vsel %vm842, %v797, %v799
        %v845 = vsel %vm842, %v801, %v803
        %v846 = vsel %vm842, %v803, %v805
        %v847 = vsel %vm842, %v807, %v809
        %v848 = vsel %vm842, %v809, %v811
        %v849 = vsel %vm842, %v813, %v815
        %v850 = vsel %vm842, %v815, %v817
        %v851 = vsel %vm842, %v819, %v821
        %v852 = vsel %vm842, %v821, %v823
        %v853 = vsel %vm842, %v825, %v827
        %v854 = vsel %vm842, %v827, %v829
        %v855 = vsel %vm842, %v831, %v833
        %v856 = vsel %vm842, %v833, %v835
        %v857 = vsel %vm842, %v837, %v839
        %v858 = vsel %vm842, %v839, %v841
        %v883 = vadd.f32 %v646, %v843
        %v884 = vadd.f32 %v647, %v844
        %v885 = vadd.f32 %v648, %v799
        %v886 = vadd.f32 %v649, %v845
        %v887 = vadd.f32 %v650, %v846
        %v888 = vadd.f32 %v651, %v805
        %v889 = vadd.f32 %v652, %v847
        %v890 = vadd.f32 %v653, %v848
        %v891 = vadd.f32 %v654, %v811
        %v892 = vadd.f32 %v655, %v849
        %v893 = vadd.f32 %v656, %v850
        %v894 = vadd.f32 %v657, %v817
        %v895 = vadd.f32 %v658, %v851
        %v896 = vadd.f32 %v659, %v852
        %v897 = vadd.f32 %v660, %v823
        %v898 = vadd.f32 %v661, %v853
        %v899 = vadd.f32 %v662, %v854
        %v900 = vadd.f32 %v663, %v829
        %v901 = vadd.f32 %v664, %v855
        %v902 = vadd.f32 %v665, %v856
        %v903 = vadd.f32 %v666, %v835
        %v904 = vadd.f32 %v667, %v857
        %v905 = vadd.f32 %v668, %v858
        %v906 = vadd.f32 %v669, %v841
        %907 = vset.pattern.permute.xlu0 3
        %908 = vperm.xlu0 %907, %v338
        %v909 = vpop.permute.xlu0 %908
        %911 = vset.pattern.permute.xlu0 3
        %912 = vperm.xlu0 %911, %v339
        %v913 = vpop.permute.xlu0 %912
        %915 = vset.pattern.permute.xlu0 3
        %916 = vperm.xlu0 %915, %v340
        %v917 = vpop.permute.xlu0 %916
        %919 = vset.pattern.permute.xlu0 3
        %920 = vperm.xlu0 %919, %v341
        %v921 = vpop.permute.xlu0 %920
        %923 = vset.pattern.permute.xlu0 3
        %924 = vperm.xlu0 %923, %v342
        %v925 = vpop.permute.xlu0 %924
        %927 = vset.pattern.permute.xlu0 3
        %928 = vperm.xlu0 %927, %v343
        %v929 = vpop.permute.xlu0 %928
        %931 = vset.pattern.permute.xlu0 3
        %932 = vperm.xlu0 %931, %v344
        %v933 = vpop.permute.xlu0 %932
        %935 = vset.pattern.permute.xlu0 3
        %936 = vperm.xlu0 %935, %v345
        %v937 = vpop.permute.xlu0 %936
        %v939 = vmul.f32 %v346, %v909
        %v940 = vmul.f32 %v347, %v909
        %v941 = vmul.f32 %v348, %v909
        %v942 = vmul.f32 %v349, %v913
        %v943 = vmul.f32 %v350, %v913
        %v944 = vmul.f32 %v351, %v913
        %v945 = vmul.f32 %v352, %v917
        %v946 = vmul.f32 %v353, %v917
        %v947 = vmul.f32 %v354, %v917
        %v948 = vmul.f32 %v355, %v921
        %v949 = vmul.f32 %v356, %v921
        %v950 = vmul.f32 %v357, %v921
        %v951 = vmul.f32 %v358, %v925
        %v952 = vmul.f32 %v359, %v925
        %v953 = vmul.f32 %v360, %v925
        %v954 = vmul.f32 %v361, %v929
        %v955 = vmul.f32 %v362, %v929
        %v956 = vmul.f32 %v363, %v929
        %v957 = vmul.f32 %v364, %v933
        %v958 = vmul.f32 %v365, %v933
        %v959 = vmul.f32 %v366, %v933
        %v960 = vmul.f32 %v367, %v937
        %v961 = vmul.f32 %v368, %v937
        %v962 = vmul.f32 %v369, %v937
        %963 = vrot.lane.b32.xlu0 %v439, 127
        %v964 = vpop.permute.xlu0 %963
        %965 = vrot.lane.b32.xlu0 %v443, 127
        %v966 = vpop.permute.xlu0 %965
        %v967 = vsel %vm605, %v964, %v966
        %v971 = vmul.f32 %v939, %v964
        %v972 = vmul.f32 %v940, %v967
        %v973 = vmul.f32 %v941, %v966
        %v974 = vmul.f32 %v942, %v964
        %v975 = vmul.f32 %v943, %v967
        %v976 = vmul.f32 %v944, %v966
        %v977 = vmul.f32 %v945, %v964
        %v978 = vmul.f32 %v946, %v967
        %v979 = vmul.f32 %v947, %v966
        %v980 = vmul.f32 %v948, %v964
        %v981 = vmul.f32 %v949, %v967
        %v982 = vmul.f32 %v950, %v966
        %v983 = vmul.f32 %v951, %v964
        %v984 = vmul.f32 %v952, %v967
        %v985 = vmul.f32 %v953, %v966
        %v986 = vmul.f32 %v954, %v964
        %v987 = vmul.f32 %v955, %v967
        %v988 = vmul.f32 %v956, %v966
        %v989 = vmul.f32 %v957, %v964
        %v990 = vmul.f32 %v958, %v967
        %v991 = vmul.f32 %v959, %v966
        %v992 = vmul.f32 %v960, %v964
        %v993 = vmul.f32 %v961, %v967
        %v994 = vmul.f32 %v962, %v966
        %1019 = vrot.lane.b32.xlu0 %v971, 112
        %v1020 = vpop.permute.xlu0 %1019
        %1021 = vrot.lane.b32.xlu0 %v972, 112
        %v1022 = vpop.permute.xlu0 %1021
        %1023 = vrot.lane.b32.xlu0 %v973, 112
        %v1024 = vpop.permute.xlu0 %1023
        %1025 = vrot.lane.b32.xlu0 %v974, 112
        %v1026 = vpop.permute.xlu0 %1025
        %1027 = vrot.lane.b32.xlu0 %v975, 112
        %v1028 = vpop.permute.xlu0 %1027
        %1029 = vrot.lane.b32.xlu0 %v976, 112
        %v1030 = vpop.permute.xlu0 %1029
        %1031 = vrot.lane.b32.xlu0 %v977, 112
        %v1032 = vpop.permute.xlu0 %1031
        %1033 = vrot.lane.b32.xlu0 %v978, 112
        %v1034 = vpop.permute.xlu0 %1033
        %1035 = vrot.lane.b32.xlu0 %v979, 112
        %v1036 = vpop.permute.xlu0 %1035
        %1037 = vrot.lane.b32.xlu0 %v980, 112
        %v1038 = vpop.permute.xlu0 %1037
        %1039 = vrot.lane.b32.xlu0 %v981, 112
        %v1040 = vpop.permute.xlu0 %1039
        %1041 = vrot.lane.b32.xlu0 %v982, 112
        %v1042 = vpop.permute.xlu0 %1041
        %1043 = vrot.lane.b32.xlu0 %v983, 112
        %v1044 = vpop.permute.xlu0 %1043
        %1045 = vrot.lane.b32.xlu0 %v984, 112
        %v1046 = vpop.permute.xlu0 %1045
        %1047 = vrot.lane.b32.xlu0 %v985, 112
        %v1048 = vpop.permute.xlu0 %1047
        %1049 = vrot.lane.b32.xlu0 %v986, 112
        %v1050 = vpop.permute.xlu0 %1049
        %1051 = vrot.lane.b32.xlu0 %v987, 112
        %v1052 = vpop.permute.xlu0 %1051
        %1053 = vrot.lane.b32.xlu0 %v988, 112
        %v1054 = vpop.permute.xlu0 %1053
        %1055 = vrot.lane.b32.xlu0 %v989, 112
        %v1056 = vpop.permute.xlu0 %1055
        %1057 = vrot.lane.b32.xlu0 %v990, 112
        %v1058 = vpop.permute.xlu0 %1057
        %1059 = vrot.lane.b32.xlu0 %v991, 112
        %v1060 = vpop.permute.xlu0 %1059
        %1061 = vrot.lane.b32.xlu0 %v992, 112
        %v1062 = vpop.permute.xlu0 %1061
        %1063 = vrot.lane.b32.xlu0 %v993, 112
        %v1064 = vpop.permute.xlu0 %1063
        %1065 = vrot.lane.b32.xlu0 %v994, 112
        %v1066 = vpop.permute.xlu0 %1065
        %vm1067 = vcmask 916480
        %v1068 = vsel %vm1067, %v1020, %v1022
        %v1069 = vsel %vm1067, %v1022, %v1024
        %v1070 = vsel %vm1067, %v1026, %v1028
        %v1071 = vsel %vm1067, %v1028, %v1030
        %v1072 = vsel %vm1067, %v1032, %v1034
        %v1073 = vsel %vm1067, %v1034, %v1036
        %v1074 = vsel %vm1067, %v1038, %v1040
        %v1075 = vsel %vm1067, %v1040, %v1042
        %v1076 = vsel %vm1067, %v1044, %v1046
        %v1077 = vsel %vm1067, %v1046, %v1048
        %v1078 = vsel %vm1067, %v1050, %v1052
        %v1079 = vsel %vm1067, %v1052, %v1054
        %v1080 = vsel %vm1067, %v1056, %v1058
        %v1081 = vsel %vm1067, %v1058, %v1060
        %v1082 = vsel %vm1067, %v1062, %v1064
        %v1083 = vsel %vm1067, %v1064, %v1066
        %v1108 = vadd.f32 %v883, %v1068
        %v1109 = vadd.f32 %v884, %v1069
        %v1110 = vadd.f32 %v885, %v1024
        %v1111 = vadd.f32 %v886, %v1070
        %v1112 = vadd.f32 %v887, %v1071
        %v1113 = vadd.f32 %v888, %v1030
        %v1114 = vadd.f32 %v889, %v1072
        %v1115 = vadd.f32 %v890, %v1073
        %v1116 = vadd.f32 %v891, %v1036
        %v1117 = vadd.f32 %v892, %v1074
        %v1118 = vadd.f32 %v893, %v1075
        %v1119 = vadd.f32 %v894, %v1042
        %v1120 = vadd.f32 %v895, %v1076
        %v1121 = vadd.f32 %v896, %v1077
        %v1122 = vadd.f32 %v897, %v1048
        %v1123 = vadd.f32 %v898, %v1078
        %v1124 = vadd.f32 %v899, %v1079
        %v1125 = vadd.f32 %v900, %v1054
        %v1126 = vadd.f32 %v901, %v1080
        %v1127 = vadd.f32 %v902, %v1081
        %v1128 = vadd.f32 %v903, %v1060
        %v1129 = vadd.f32 %v904, %v1082
        %v1130 = vadd.f32 %v905, %v1083
        %v1131 = vadd.f32 %v906, %v1066
        %1132 = vset.pattern.permute.xlu0 4
        %1133 = vperm.xlu0 %1132, %v338
        %v1134 = vpop.permute.xlu0 %1133
        %1136 = vset.pattern.permute.xlu0 4
        %1137 = vperm.xlu0 %1136, %v339
        %v1138 = vpop.permute.xlu0 %1137
        %1140 = vset.pattern.permute.xlu0 4
        %1141 = vperm.xlu0 %1140, %v340
        %v1142 = vpop.permute.xlu0 %1141
        %1144 = vset.pattern.permute.xlu0 4
        %1145 = vperm.xlu0 %1144, %v341
        %v1146 = vpop.permute.xlu0 %1145
        %1148 = vset.pattern.permute.xlu0 4
        %1149 = vperm.xlu0 %1148, %v342
        %v1150 = vpop.permute.xlu0 %1149
        %1152 = vset.pattern.permute.xlu0 4
        %1153 = vperm.xlu0 %1152, %v343
        %v1154 = vpop.permute.xlu0 %1153
        %1156 = vset.pattern.permute.xlu0 4
        %1157 = vperm.xlu0 %1156, %v344
        %v1158 = vpop.permute.xlu0 %1157
        %1160 = vset.pattern.permute.xlu0 4
        %1161 = vperm.xlu0 %1160, %v345
        %v1162 = vpop.permute.xlu0 %1161
        %v1164 = vmul.f32 %v347, %v1134
        %v1165 = vmul.f32 %v348, %v1134
        %v1166 = vmul.f32 %v350, %v1138
        %v1167 = vmul.f32 %v351, %v1138
        %v1168 = vmul.f32 %v353, %v1142
        %v1169 = vmul.f32 %v354, %v1142
        %v1170 = vmul.f32 %v356, %v1146
        %v1171 = vmul.f32 %v357, %v1146
        %v1172 = vmul.f32 %v359, %v1150
        %v1173 = vmul.f32 %v360, %v1150
        %v1174 = vmul.f32 %v362, %v1154
        %v1175 = vmul.f32 %v363, %v1154
        %v1176 = vmul.f32 %v365, %v1158
        %v1177 = vmul.f32 %v366, %v1158
        %v1178 = vmul.f32 %v368, %v1162
        %v1179 = vmul.f32 %v369, %v1162
        %1196 = vrot.lane.b32.xlu0 %v1164, 111
        %v1197 = vpop.permute.xlu0 %1196
        %1198 = vrot.lane.b32.xlu0 %v1165, 111
        %v1199 = vpop.permute.xlu0 %1198
        %1200 = vrot.lane.b32.xlu0 %v1166, 111
        %v1201 = vpop.permute.xlu0 %1200
        %1202 = vrot.lane.b32.xlu0 %v1167, 111
        %v1203 = vpop.permute.xlu0 %1202
        %1204 = vrot.lane.b32.xlu0 %v1168, 111
        %v1205 = vpop.permute.xlu0 %1204
        %1206 = vrot.lane.b32.xlu0 %v1169, 111
        %v1207 = vpop.permute.xlu0 %1206
        %1208 = vrot.lane.b32.xlu0 %v1170, 111
        %v1209 = vpop.permute.xlu0 %1208
        %1210 = vrot.lane.b32.xlu0 %v1171, 111
        %v1211 = vpop.permute.xlu0 %1210
        %1212 = vrot.lane.b32.xlu0 %v1172, 111
        %v1213 = vpop.permute.xlu0 %1212
        %1214 = vrot.lane.b32.xlu0 %v1173, 111
        %v1215 = vpop.permute.xlu0 %1214
        %1216 = vrot.lane.b32.xlu0 %v1174, 111
        %v1217 = vpop.permute.xlu0 %1216
        %1218 = vrot.lane.b32.xlu0 %v1175, 111
        %v1219 = vpop.permute.xlu0 %1218
        %1220 = vrot.lane.b32.xlu0 %v1176, 111
        %v1221 = vpop.permute.xlu0 %1220
        %1222 = vrot.lane.b32.xlu0 %v1177, 111
        %v1223 = vpop.permute.xlu0 %1222
        %1224 = vrot.lane.b32.xlu0 %v1178, 111
        %v1225 = vpop.permute.xlu0 %1224
        %1226 = vrot.lane.b32.xlu0 %v1179, 111
        %v1227 = vpop.permute.xlu0 %1226
        %v1228 = vsel %vm448, %v1197, %v1199
        %v1229 = vsel %vm448, %v1201, %v1203
        %v1230 = vsel %vm448, %v1205, %v1207
        %v1231 = vsel %vm448, %v1209, %v1211
        %v1232 = vsel %vm448, %v1213, %v1215
        %v1233 = vsel %vm448, %v1217, %v1219
        %v1234 = vsel %vm448, %v1221, %v1223
        %v1235 = vsel %vm448, %v1225, %v1227
        %v1260 = vadd.f32 %v1108, %v1197
        %v1261 = vadd.f32 %v1109, %v1228
        %v1262 = vadd.f32 %v1110, %v1199
        %v1263 = vadd.f32 %v1111, %v1201
        %v1264 = vadd.f32 %v1112, %v1229
        %v1265 = vadd.f32 %v1113, %v1203
        %v1266 = vadd.f32 %v1114, %v1205
        %v1267 = vadd.f32 %v1115, %v1230
        %v1268 = vadd.f32 %v1116, %v1207
        %v1269 = vadd.f32 %v1117, %v1209
        %v1270 = vadd.f32 %v1118, %v1231
        %v1271 = vadd.f32 %v1119, %v1211
        %v1272 = vadd.f32 %v1120, %v1213
        %v1273 = vadd.f32 %v1121, %v1232
        %v1274 = vadd.f32 %v1122, %v1215
        %v1275 = vadd.f32 %v1123, %v1217
        %v1276 = vadd.f32 %v1124, %v1233
        %v1277 = vadd.f32 %v1125, %v1219
        %v1278 = vadd.f32 %v1126, %v1221
        %v1279 = vadd.f32 %v1127, %v1234
        %v1280 = vadd.f32 %v1128, %v1223
        %v1281 = vadd.f32 %v1129, %v1225
        %v1282 = vadd.f32 %v1130, %v1235
        %v1283 = vadd.f32 %v1131, %v1227
        %v1284 = vld [vmem:[#allocation2 + $0x8] sm:$0xff]
        %v1285 = vld [vmem:[#allocation2 + $0x10] sm:$0xff]
        %v1286 = vld [vmem:[#allocation2 + $0x18] sm:$0xff]
        %v1287 = vld [vmem:[#allocation2 + $0x28] sm:$0xff]
        %v1288 = vld [vmem:[#allocation2 + $0x30] sm:$0xff]
        %v1289 = vld [vmem:[#allocation2 + $0x38] sm:$0xff]
        %v1290 = vld [vmem:[#allocation2 + $0x48] sm:$0xff]
        %v1291 = vld [vmem:[#allocation2 + $0x50] sm:$0xff]
        %v1292 = vld [vmem:[#allocation2 + $0x58] sm:$0xff]
        %v1293 = vld [vmem:[#allocation2 + $0x68] sm:$0xff]
        %v1294 = vld [vmem:[#allocation2 + $0x70] sm:$0xff]
        %v1295 = vld [vmem:[#allocation2 + $0x78] sm:$0xff]
        %v1296 = vld [vmem:[#allocation2 + $0x88] sm:$0xff]
        %v1297 = vld [vmem:[#allocation2 + $0x90] sm:$0xff]
        %v1298 = vld [vmem:[#allocation2 + $0x98] sm:$0xff]
        %v1299 = vld [vmem:[#allocation2 + $0xa8] sm:$0xff]
        %v1300 = vld [vmem:[#allocation2 + $0xb0] sm:$0xff]
        %v1301 = vld [vmem:[#allocation2 + $0xb8] sm:$0xff]
        %v1302 = vld [vmem:[#allocation2 + $0xc8] sm:$0xff]
        %v1303 = vld [vmem:[#allocation2 + $0xd0] sm:$0xff]
        %v1304 = vld [vmem:[#allocation2 + $0xd8] sm:$0xff]
        %v1305 = vld [vmem:[#allocation2 + $0xe8] sm:$0xff]
        %v1306 = vld [vmem:[#allocation2 + $0xf0] sm:$0xff]
        %v1307 = vld [vmem:[#allocation2 + $0xf8] sm:$0xff]
        %1308 = vset.pattern.permute.xlu0 5
        %1309 = vperm.xlu0 %1308, %v338
        %v1310 = vpop.permute.xlu0 %1309
        %1312 = vset.pattern.permute.xlu0 5
        %1313 = vperm.xlu0 %1312, %v339
        %v1314 = vpop.permute.xlu0 %1313
        %1316 = vset.pattern.permute.xlu0 5
        %1317 = vperm.xlu0 %1316, %v340
        %v1318 = vpop.permute.xlu0 %1317
        %1320 = vset.pattern.permute.xlu0 5
        %1321 = vperm.xlu0 %1320, %v341
        %v1322 = vpop.permute.xlu0 %1321
        %1324 = vset.pattern.permute.xlu0 5
        %1325 = vperm.xlu0 %1324, %v342
        %v1326 = vpop.permute.xlu0 %1325
        %1328 = vset.pattern.permute.xlu0 5
        %1329 = vperm.xlu0 %1328, %v343
        %v1330 = vpop.permute.xlu0 %1329
        %1332 = vset.pattern.permute.xlu0 5
        %1333 = vperm.xlu0 %1332, %v344
        %v1334 = vpop.permute.xlu0 %1333
        %1336 = vset.pattern.permute.xlu0 5
        %1337 = vperm.xlu0 %1336, %v345
        %v1338 = vpop.permute.xlu0 %1337
        %v1340 = vmul.f32 %v1284, %v1310
        %v1341 = vmul.f32 %v1285, %v1310
        %v1342 = vmul.f32 %v1286, %v1310
        %v1343 = vmul.f32 %v1287, %v1314
        %v1344 = vmul.f32 %v1288, %v1314
        %v1345 = vmul.f32 %v1289, %v1314
        %v1346 = vmul.f32 %v1290, %v1318
        %v1347 = vmul.f32 %v1291, %v1318
        %v1348 = vmul.f32 %v1292, %v1318
        %v1349 = vmul.f32 %v1293, %v1322
        %v1350 = vmul.f32 %v1294, %v1322
        %v1351 = vmul.f32 %v1295, %v1322
        %v1352 = vmul.f32 %v1296, %v1326
        %v1353 = vmul.f32 %v1297, %v1326
        %v1354 = vmul.f32 %v1298, %v1326
        %v1355 = vmul.f32 %v1299, %v1330
        %v1356 = vmul.f32 %v1300, %v1330
        %v1357 = vmul.f32 %v1301, %v1330
        %v1358 = vmul.f32 %v1302, %v1334
        %v1359 = vmul.f32 %v1303, %v1334
        %v1360 = vmul.f32 %v1304, %v1334
        %v1361 = vmul.f32 %v1305, %v1338
        %v1362 = vmul.f32 %v1306, %v1338
        %v1363 = vmul.f32 %v1307, %v1338
        %1364 = vrot.lane.b32.xlu0 %v732, 1
        %v1365 = vpop.permute.xlu0 %1364
        %1366 = vrot.lane.b32.xlu0 %v736, 1
        %v1367 = vpop.permute.xlu0 %1366
        %vm1368 = vcmask 7168
        %v1369 = vsel %vm1368, %v1365, %v1367
        %v1373 = vmul.f32 %v1340, %v1365
        %v1374 = vmul.f32 %v1341, %v1369
        %v1375 = vmul.f32 %v1342, %v1367
        %v1376 = vmul.f32 %v1343, %v1365
        %v1377 = vmul.f32 %v1344, %v1369
        %v1378 = vmul.f32 %v1345, %v1367
        %v1379 = vmul.f32 %v1346, %v1365
        %v1380 = vmul.f32 %v1347, %v1369
        %v1381 = vmul.f32 %v1348, %v1367
        %v1382 = vmul.f32 %v1349, %v1365
        %v1383 = vmul.f32 %v1350, %v1369
        %v1384 = vmul.f32 %v1351, %v1367
        %v1385 = vmul.f32 %v1352, %v1365
        %v1386 = vmul.f32 %v1353, %v1369
        %v1387 = vmul.f32 %v1354, %v1367
        %v1388 = vmul.f32 %v1355, %v1365
        %v1389 = vmul.f32 %v1356, %v1369
        %v1390 = vmul.f32 %v1357, %v1367
        %v1391 = vmul.f32 %v1358, %v1365
        %v1392 = vmul.f32 %v1359, %v1369
        %v1393 = vmul.f32 %v1360, %v1367
        %v1394 = vmul.f32 %v1361, %v1365
        %v1395 = vmul.f32 %v1362, %v1369
        %v1396 = vmul.f32 %v1363, %v1367
        %1421 = vrot.lane.b32.xlu0 %v1373, 110
        %v1422 = vpop.permute.xlu0 %1421
        %1423 = vrot.lane.b32.xlu0 %v1374, 110
        %v1424 = vpop.permute.xlu0 %1423
        %1425 = vrot.lane.b32.xlu0 %v1375, 110
        %v1426 = vpop.permute.xlu0 %1425
        %1427 = vrot.lane.b32.xlu0 %v1376, 110
        %v1428 = vpop.permute.xlu0 %1427
        %1429 = vrot.lane.b32.xlu0 %v1377, 110
        %v1430 = vpop.permute.xlu0 %1429
        %1431 = vrot.lane.b32.xlu0 %v1378, 110
        %v1432 = vpop.permute.xlu0 %1431
        %1433 = vrot.lane.b32.xlu0 %v1379, 110
        %v1434 = vpop.permute.xlu0 %1433
        %1435 = vrot.lane.b32.xlu0 %v1380, 110
        %v1436 = vpop.permute.xlu0 %1435
        %1437 = vrot.lane.b32.xlu0 %v1381, 110
        %v1438 = vpop.permute.xlu0 %1437
        %1439 = vrot.lane.b32.xlu0 %v1382, 110
        %v1440 = vpop.permute.xlu0 %1439
        %1441 = vrot.lane.b32.xlu0 %v1383, 110
        %v1442 = vpop.permute.xlu0 %1441
        %1443 = vrot.lane.b32.xlu0 %v1384, 110
        %v1444 = vpop.permute.xlu0 %1443
        %1445 = vrot.lane.b32.xlu0 %v1385, 110
        %v1446 = vpop.permute.xlu0 %1445
        %1447 = vrot.lane.b32.xlu0 %v1386, 110
        %v1448 = vpop.permute.xlu0 %1447
        %1449 = vrot.lane.b32.xlu0 %v1387, 110
        %v1450 = vpop.permute.xlu0 %1449
        %1451 = vrot.lane.b32.xlu0 %v1388, 110
        %v1452 = vpop.permute.xlu0 %1451
        %1453 = vrot.lane.b32.xlu0 %v1389, 110
        %v1454 = vpop.permute.xlu0 %1453
        %1455 = vrot.lane.b32.xlu0 %v1390, 110
        %v1456 = vpop.permute.xlu0 %1455
        %1457 = vrot.lane.b32.xlu0 %v1391, 110
        %v1458 = vpop.permute.xlu0 %1457
        %1459 = vrot.lane.b32.xlu0 %v1392, 110
        %v1460 = vpop.permute.xlu0 %1459
        %1461 = vrot.lane.b32.xlu0 %v1393, 110
        %v1462 = vpop.permute.xlu0 %1461
        %1463 = vrot.lane.b32.xlu0 %v1394, 110
        %v1464 = vpop.permute.xlu0 %1463
        %1465 = vrot.lane.b32.xlu0 %v1395, 110
        %v1466 = vpop.permute.xlu0 %1465
        %1467 = vrot.lane.b32.xlu0 %v1396, 110
        %v1468 = vpop.permute.xlu0 %1467
        %vm1469 = vcmask 900096
        %v1470 = vsel %vm1469, %v1422, %v1424
        %v1471 = vsel %vm1469, %v1424, %v1426
        %v1472 = vsel %vm1469, %v1428, %v1430
        %v1473 = vsel %vm1469, %v1430, %v1432
        %v1474 = vsel %vm1469, %v1434, %v1436
        %v1475 = vsel %vm1469, %v1436, %v1438
        %v1476 = vsel %vm1469, %v1440, %v1442
        %v1477 = vsel %vm1469, %v1442, %v1444
        %v1478 = vsel %vm1469, %v1446, %v1448
        %v1479 = vsel %vm1469, %v1448, %v1450
        %v1480 = vsel %vm1469, %v1452, %v1454
        %v1481 = vsel %vm1469, %v1454, %v1456
        %v1482 = vsel %vm1469, %v1458, %v1460
        %v1483 = vsel %vm1469, %v1460, %v1462
        %v1484 = vsel %vm1469, %v1464, %v1466
        %v1485 = vsel %vm1469, %v1466, %v1468
        %v1510 = vadd.f32 %v1260, %v1422
        %v1511 = vadd.f32 %v1261, %v1470
        %v1512 = vadd.f32 %v1262, %v1471
        %v1513 = vadd.f32 %v1263, %v1428
        %v1514 = vadd.f32 %v1264, %v1472
        %v1515 = vadd.f32 %v1265, %v1473
        %v1516 = vadd.f32 %v1266, %v1434
        %v1517 = vadd.f32 %v1267, %v1474
        %v1518 = vadd.f32 %v1268, %v1475
        %v1519 = vadd.f32 %v1269, %v1440
        %v1520 = vadd.f32 %v1270, %v1476
        %v1521 = vadd.f32 %v1271, %v1477
        %v1522 = vadd.f32 %v1272, %v1446
        %v1523 = vadd.f32 %v1273, %v1478
        %v1524 = vadd.f32 %v1274, %v1479
        %v1525 = vadd.f32 %v1275, %v1452
        %v1526 = vadd.f32 %v1276, %v1480
        %v1527 = vadd.f32 %v1277, %v1481
        %v1528 = vadd.f32 %v1278, %v1458
        %v1529 = vadd.f32 %v1279, %v1482
        %v1530 = vadd.f32 %v1280, %v1483
        %v1531 = vadd.f32 %v1281, %v1464
        %v1532 = vadd.f32 %v1282, %v1484
        %v1533 = vadd.f32 %v1283, %v1485
        %1534 = vset.pattern.permute.xlu0 6
        %1535 = vperm.xlu0 %1534, %v338
        %v1536 = vpop.permute.xlu0 %1535
        %1538 = vset.pattern.permute.xlu0 6
        %1539 = vperm.xlu0 %1538, %v339
        %v1540 = vpop.permute.xlu0 %1539
        %1542 = vset.pattern.permute.xlu0 6
        %1543 = vperm.xlu0 %1542, %v340
        %v1544 = vpop.permute.xlu0 %1543
        %1546 = vset.pattern.permute.xlu0 6
        %1547 = vperm.xlu0 %1546, %v341
        %v1548 = vpop.permute.xlu0 %1547
        %1550 = vset.pattern.permute.xlu0 6
        %1551 = vperm.xlu0 %1550, %v342
        %v1552 = vpop.permute.xlu0 %1551
        %1554 = vset.pattern.permute.xlu0 6
        %1555 = vperm.xlu0 %1554, %v343
        %v1556 = vpop.permute.xlu0 %1555
        %1558 = vset.pattern.permute.xlu0 6
        %1559 = vperm.xlu0 %1558, %v344
        %v1560 = vpop.permute.xlu0 %1559
        %1562 = vset.pattern.permute.xlu0 6
        %1563 = vperm.xlu0 %1562, %v345
        %v1564 = vpop.permute.xlu0 %1563
        %v1566 = vmul.f32 %v1284, %v1536
        %v1567 = vmul.f32 %v1285, %v1536
        %v1568 = vmul.f32 %v1286, %v1536
        %v1569 = vmul.f32 %v1287, %v1540
        %v1570 = vmul.f32 %v1288, %v1540
        %v1571 = vmul.f32 %v1289, %v1540
        %v1572 = vmul.f32 %v1290, %v1544
        %v1573 = vmul.f32 %v1291, %v1544
        %v1574 = vmul.f32 %v1292, %v1544
        %v1575 = vmul.f32 %v1293, %v1548
        %v1576 = vmul.f32 %v1294, %v1548
        %v1577 = vmul.f32 %v1295, %v1548
        %v1578 = vmul.f32 %v1296, %v1552
        %v1579 = vmul.f32 %v1297, %v1552
        %v1580 = vmul.f32 %v1298, %v1552
        %v1581 = vmul.f32 %v1299, %v1556
        %v1582 = vmul.f32 %v1300, %v1556
        %v1583 = vmul.f32 %v1301, %v1556
        %v1584 = vmul.f32 %v1302, %v1560
        %v1585 = vmul.f32 %v1303, %v1560
        %v1586 = vmul.f32 %v1304, %v1560
        %v1587 = vmul.f32 %v1305, %v1564
        %v1588 = vmul.f32 %v1306, %v1564
        %v1589 = vmul.f32 %v1307, %v1564
        %1590 = vrot.lane.b32.xlu0 %v439, 15
        %v1591 = vpop.permute.xlu0 %1590
        %1592 = vrot.lane.b32.xlu0 %v443, 15
        %v1593 = vpop.permute.xlu0 %1592
        %vm1594 = vcmask 121856
        %v1595 = vsel %vm1594, %v1591, %v1593
        %v1599 = vmul.f32 %v1566, %v1591
        %v1600 = vmul.f32 %v1567, %v1595
        %v1601 = vmul.f32 %v1568, %v1593
        %v1602 = vmul.f32 %v1569, %v1591
        %v1603 = vmul.f32 %v1570, %v1595
        %v1604 = vmul.f32 %v1571, %v1593
        %v1605 = vmul.f32 %v1572, %v1591
        %v1606 = vmul.f32 %v1573, %v1595
        %v1607 = vmul.f32 %v1574, %v1593
        %v1608 = vmul.f32 %v1575, %v1591
        %v1609 = vmul.f32 %v1576, %v1595
        %v1610 = vmul.f32 %v1577, %v1593
        %v1611 = vmul.f32 %v1578, %v1591
        %v1612 = vmul.f32 %v1579, %v1595
        %v1613 = vmul.f32 %v1580, %v1593
        %v1614 = vmul.f32 %v1581, %v1591
        %v1615 = vmul.f32 %v1582, %v1595
        %v1616 = vmul.f32 %v1583, %v1593
        %v1617 = vmul.f32 %v1584, %v1591
        %v1618 = vmul.f32 %v1585, %v1595
        %v1619 = vmul.f32 %v1586, %v1593
        %v1620 = vmul.f32 %v1587, %v1591
        %v1621 = vmul.f32 %v1588, %v1595
        %v1622 = vmul.f32 %v1589, %v1593
        %1647 = vrot.lane.b32.xlu0 %v1599, 96
        %v1648 = vpop.permute.xlu0 %1647
        %1649 = vrot.lane.b32.xlu0 %v1600, 96
        %v1650 = vpop.permute.xlu0 %1649
        %1651 = vrot.lane.b32.xlu0 %v1601, 96
        %v1652 = vpop.permute.xlu0 %1651
        %1653 = vrot.lane.b32.xlu0 %v1602, 96
        %v1654 = vpop.permute.xlu0 %1653
        %1655 = vrot.lane.b32.xlu0 %v1603, 96
        %v1656 = vpop.permute.xlu0 %1655
        %1657 = vrot.lane.b32.xlu0 %v1604, 96
        %v1658 = vpop.permute.xlu0 %1657
        %1659 = vrot.lane.b32.xlu0 %v1605, 96
        %v1660 = vpop.permute.xlu0 %1659
        %1661 = vrot.lane.b32.xlu0 %v1606, 96
        %v1662 = vpop.permute.xlu0 %1661
        %1663 = vrot.lane.b32.xlu0 %v1607, 96
        %v1664 = vpop.permute.xlu0 %1663
        %1665 = vrot.lane.b32.xlu0 %v1608, 96
        %v1666 = vpop.permute.xlu0 %1665
        %1667 = vrot.lane.b32.xlu0 %v1609, 96
        %v1668 = vpop.permute.xlu0 %1667
        %1669 = vrot.lane.b32.xlu0 %v1610, 96
        %v1670 = vpop.permute.xlu0 %1669
        %1671 = vrot.lane.b32.xlu0 %v1611, 96
        %v1672 = vpop.permute.xlu0 %1671
        %1673 = vrot.lane.b32.xlu0 %v1612, 96
        %v1674 = vpop.permute.xlu0 %1673
        %1675 = vrot.lane.b32.xlu0 %v1613, 96
        %v1676 = vpop.permute.xlu0 %1675
        %1677 = vrot.lane.b32.xlu0 %v1614, 96
        %v1678 = vpop.permute.xlu0 %1677
        %1679 = vrot.lane.b32.xlu0 %v1615, 96
        %v1680 = vpop.permute.xlu0 %1679
        %1681 = vrot.lane.b32.xlu0 %v1616, 96
        %v1682 = vpop.permute.xlu0 %1681
        %1683 = vrot.lane.b32.xlu0 %v1617, 96
        %v1684 = vpop.permute.xlu0 %1683
        %1685 = vrot.lane.b32.xlu0 %v1618, 96
        %v1686 = vpop.permute.xlu0 %1685
        %1687 = vrot.lane.b32.xlu0 %v1619, 96
        %v1688 = vpop.permute.xlu0 %1687
        %1689 = vrot.lane.b32.xlu0 %v1620, 96
        %v1690 = vpop.permute.xlu0 %1689
        %1691 = vrot.lane.b32.xlu0 %v1621, 96
        %v1692 = vpop.permute.xlu0 %1691
        %1693 = vrot.lane.b32.xlu0 %v1622, 96
        %v1694 = vpop.permute.xlu0 %1693
        %vm1695 = vcmask 785408
        %v1696 = vsel %vm1695, %v1648, %v1650
        %v1697 = vsel %vm1695, %v1650, %v1652
        %v1698 = vsel %vm1695, %v1654, %v1656
        %v1699 = vsel %vm1695, %v1656, %v1658
        %v1700 = vsel %vm1695, %v1660, %v1662
        %v1701 = vsel %vm1695, %v1662, %v1664
        %v1702 = vsel %vm1695, %v1666, %v1668
        %v1703 = vsel %vm1695, %v1668, %v1670
        %v1704 = vsel %vm1695, %v1672, %v1674
        %v1705 = vsel %vm1695, %v1674, %v1676
        %v1706 = vsel %vm1695, %v1678, %v1680
        %v1707 = vsel %vm1695, %v1680, %v1682
        %v1708 = vsel %vm1695, %v1684, %v1686
        %v1709 = vsel %vm1695, %v1686, %v1688
        %v1710 = vsel %vm1695, %v1690, %v1692
        %v1711 = vsel %vm1695, %v1692, %v1694
        %v1736 = vadd.f32 %v1510, %v1648
        %v1737 = vadd.f32 %v1511, %v1696
        %v1738 = vadd.f32 %v1512, %v1697
        %v1739 = vadd.f32 %v1513, %v1654
        %v1740 = vadd.f32 %v1514, %v1698
        %v1741 = vadd.f32 %v1515, %v1699
        %v1742 = vadd.f32 %v1516, %v1660
        %v1743 = vadd.f32 %v1517, %v1700
        %v1744 = vadd.f32 %v1518, %v1701
        %v1745 = vadd.f32 %v1519, %v1666
        %v1746 = vadd.f32 %v1520, %v1702
        %v1747 = vadd.f32 %v1521, %v1703
        %v1748 = vadd.f32 %v1522, %v1672
        %v1749 = vadd.f32 %v1523, %v1704
        %v1750 = vadd.f32 %v1524, %v1705
        %v1751 = vadd.f32 %v1525, %v1678
        %v1752 = vadd.f32 %v1526, %v1706
        %v1753 = vadd.f32 %v1527, %v1707
        %v1754 = vadd.f32 %v1528, %v1684
        %v1755 = vadd.f32 %v1529, %v1708
        %v1756 = vadd.f32 %v1530, %v1709
        %v1757 = vadd.f32 %v1531, %v1690
        %v1758 = vadd.f32 %v1532, %v1710
        %v1759 = vadd.f32 %v1533, %v1711
        %1760 = vset.pattern.permute.xlu0 7
        %1761 = vperm.xlu0 %1760, %v338
        %v1762 = vpop.permute.xlu0 %1761
        %1764 = vset.pattern.permute.xlu0 7
        %1765 = vperm.xlu0 %1764, %v339
        %v1766 = vpop.permute.xlu0 %1765
        %1768 = vset.pattern.permute.xlu0 7
        %1769 = vperm.xlu0 %1768, %v340
        %v1770 = vpop.permute.xlu0 %1769
        %1772 = vset.pattern.permute.xlu0 7
        %1773 = vperm.xlu0 %1772, %v341
        %v1774 = vpop.permute.xlu0 %1773
        %1776 = vset.pattern.permute.xlu0 7
        %1777 = vperm.xlu0 %1776, %v342
        %v1778 = vpop.permute.xlu0 %1777
        %1780 = vset.pattern.permute.xlu0 7
        %1781 = vperm.xlu0 %1780, %v343
        %v1782 = vpop.permute.xlu0 %1781
        %1784 = vset.pattern.permute.xlu0 7
        %1785 = vperm.xlu0 %1784, %v344
        %v1786 = vpop.permute.xlu0 %1785
        %1788 = vset.pattern.permute.xlu0 7
        %1789 = vperm.xlu0 %1788, %v345
        %v1790 = vpop.permute.xlu0 %1789
        %v1792 = vmul.f32 %v1284, %v1762
        %v1793 = vmul.f32 %v1285, %v1762
        %v1794 = vmul.f32 %v1286, %v1762
        %v1795 = vmul.f32 %v1287, %v1766
        %v1796 = vmul.f32 %v1288, %v1766
        %v1797 = vmul.f32 %v1289, %v1766
        %v1798 = vmul.f32 %v1290, %v1770
        %v1799 = vmul.f32 %v1291, %v1770
        %v1800 = vmul.f32 %v1292, %v1770
        %v1801 = vmul.f32 %v1293, %v1774
        %v1802 = vmul.f32 %v1294, %v1774
        %v1803 = vmul.f32 %v1295, %v1774
        %v1804 = vmul.f32 %v1296, %v1778
        %v1805 = vmul.f32 %v1297, %v1778
        %v1806 = vmul.f32 %v1298, %v1778
        %v1807 = vmul.f32 %v1299, %v1782
        %v1808 = vmul.f32 %v1300, %v1782
        %v1809 = vmul.f32 %v1301, %v1782
        %v1810 = vmul.f32 %v1302, %v1786
        %v1811 = vmul.f32 %v1303, %v1786
        %v1812 = vmul.f32 %v1304, %v1786
        %v1813 = vmul.f32 %v1305, %v1790
        %v1814 = vmul.f32 %v1306, %v1790
        %v1815 = vmul.f32 %v1307, %v1790
        %1840 = vrot.lane.b32.xlu0 %v1792, 95
        %v1841 = vpop.permute.xlu0 %1840
        %1842 = vrot.lane.b32.xlu0 %v1793, 95
        %v1843 = vpop.permute.xlu0 %1842
        %1844 = vrot.lane.b32.xlu0 %v1794, 95
        %v1845 = vpop.permute.xlu0 %1844
        %1846 = vrot.lane.b32.xlu0 %v1795, 95
        %v1847 = vpop.permute.xlu0 %1846
        %1848 = vrot.lane.b32.xlu0 %v1796, 95
        %v1849 = vpop.permute.xlu0 %1848
        %1850 = vrot.lane.b32.xlu0 %v1797, 95
        %v1851 = vpop.permute.xlu0 %1850
        %1852 = vrot.lane.b32.xlu0 %v1798, 95
        %v1853 = vpop.permute.xlu0 %1852
        %1854 = vrot.lane.b32.xlu0 %v1799, 95
        %v1855 = vpop.permute.xlu0 %1854
        %1856 = vrot.lane.b32.xlu0 %v1800, 95
        %v1857 = vpop.permute.xlu0 %1856
        %1858 = vrot.lane.b32.xlu0 %v1801, 95
        %v1859 = vpop.permute.xlu0 %1858
        %1860 = vrot.lane.b32.xlu0 %v1802, 95
        %v1861 = vpop.permute.xlu0 %1860
        %1862 = vrot.lane.b32.xlu0 %v1803, 95
        %v1863 = vpop.permute.xlu0 %1862
        %1864 = vrot.lane.b32.xlu0 %v1804, 95
        %v1865 = vpop.permute.xlu0 %1864
        %1866 = vrot.lane.b32.xlu0 %v1805, 95
        %v1867 = vpop.permute.xlu0 %1866
        %1868 = vrot.lane.b32.xlu0 %v1806, 95
        %v1869 = vpop.permute.xlu0 %1868
        %1870 = vrot.lane.b32.xlu0 %v1807, 95
        %v1871 = vpop.permute.xlu0 %1870
        %1872 = vrot.lane.b32.xlu0 %v1808, 95
        %v1873 = vpop.permute.xlu0 %1872
        %1874 = vrot.lane.b32.xlu0 %v1809, 95
        %v1875 = vpop.permute.xlu0 %1874
        %1876 = vrot.lane.b32.xlu0 %v1810, 95
        %v1877 = vpop.permute.xlu0 %1876
        %1878 = vrot.lane.b32.xlu0 %v1811, 95
        %v1879 = vpop.permute.xlu0 %1878
        %1880 = vrot.lane.b32.xlu0 %v1812, 95
        %v1881 = vpop.permute.xlu0 %1880
        %1882 = vrot.lane.b32.xlu0 %v1813, 95
        %v1883 = vpop.permute.xlu0 %1882
        %1884 = vrot.lane.b32.xlu0 %v1814, 95
        %v1885 = vpop.permute.xlu0 %1884
        %1886 = vrot.lane.b32.xlu0 %v1815, 95
        %v1887 = vpop.permute.xlu0 %1886
        %vm1888 = vcmask 777216
        %v1889 = vsel %vm1888, %v1841, %v1843
        %v1890 = vsel %vm1888, %v1843, %v1845
        %v1891 = vsel %vm1888, %v1847, %v1849
        %v1892 = vsel %vm1888, %v1849, %v1851
        %v1893 = vsel %vm1888, %v1853, %v1855
        %v1894 = vsel %vm1888, %v1855, %v1857
        %v1895 = vsel %vm1888, %v1859, %v1861
        %v1896 = vsel %vm1888, %v1861, %v1863
        %v1897 = vsel %vm1888, %v1865, %v1867
        %v1898 = vsel %vm1888, %v1867, %v1869
        %v1899 = vsel %vm1888, %v1871, %v1873
        %v1900 = vsel %vm1888, %v1873, %v1875
        %v1901 = vsel %vm1888, %v1877, %v1879
        %v1902 = vsel %vm1888, %v1879, %v1881
        %v1903 = vsel %vm1888, %v1883, %v1885
        %v1904 = vsel %vm1888, %v1885, %v1887
        %v1929 = vadd.f32 %v1736, %v1841
        %v1930 = vadd.f32 %v1737, %v1889
        %v1931 = vadd.f32 %v1738, %v1890
        %v1932 = vadd.f32 %v1739, %v1847
        %v1933 = vadd.f32 %v1740, %v1891
        %v1934 = vadd.f32 %v1741, %v1892
        %v1935 = vadd.f32 %v1742, %v1853
        %v1936 = vadd.f32 %v1743, %v1893
        %v1937 = vadd.f32 %v1744, %v1894
        %v1938 = vadd.f32 %v1745, %v1859
        %v1939 = vadd.f32 %v1746, %v1895
        %v1940 = vadd.f32 %v1747, %v1896
        %v1941 = vadd.f32 %v1748, %v1865
        %v1942 = vadd.f32 %v1749, %v1897
        %v1943 = vadd.f32 %v1750, %v1898
        %v1944 = vadd.f32 %v1751, %v1871
        %v1945 = vadd.f32 %v1752, %v1899
        %v1946 = vadd.f32 %v1753, %v1900
        %v1947 = vadd.f32 %v1754, %v1877
        %v1948 = vadd.f32 %v1755, %v1901
        %v1949 = vadd.f32 %v1756, %v1902
        %v1950 = vadd.f32 %v1757, %v1883
        %v1951 = vadd.f32 %v1758, %v1903
        %v1952 = vadd.f32 %v1759, %v1904
        %1953 = vset.pattern.permute.xlu0 8
        %1954 = vperm.xlu0 %1953, %v338
        %v1955 = vpop.permute.xlu0 %1954
        %1957 = vset.pattern.permute.xlu0 8
        %1958 = vperm.xlu0 %1957, %v339
        %v1959 = vpop.permute.xlu0 %1958
        %1961 = vset.pattern.permute.xlu0 8
        %1962 = vperm.xlu0 %1961, %v340
        %v1963 = vpop.permute.xlu0 %1962
        %1965 = vset.pattern.permute.xlu0 8
        %1966 = vperm.xlu0 %1965, %v341
        %v1967 = vpop.permute.xlu0 %1966
        %1969 = vset.pattern.permute.xlu0 8
        %1970 = vperm.xlu0 %1969, %v342
        %v1971 = vpop.permute.xlu0 %1970
        %1973 = vset.pattern.permute.xlu0 8
        %1974 = vperm.xlu0 %1973, %v343
        %v1975 = vpop.permute.xlu0 %1974
        %1977 = vset.pattern.permute.xlu0 8
        %1978 = vperm.xlu0 %1977, %v344
        %v1979 = vpop.permute.xlu0 %1978
        %1981 = vset.pattern.permute.xlu0 8
        %1982 = vperm.xlu0 %1981, %v345
        %v1983 = vpop.permute.xlu0 %1982
        %v1985 = vmul.f32 %v1284, %v1955
        %v1986 = vmul.f32 %v1285, %v1955
        %v1987 = vmul.f32 %v1286, %v1955
        %v1988 = vmul.f32 %v1287, %v1959
        %v1989 = vmul.f32 %v1288, %v1959
        %v1990 = vmul.f32 %v1289, %v1959
        %v1991 = vmul.f32 %v1290, %v1963
        %v1992 = vmul.f32 %v1291, %v1963
        %v1993 = vmul.f32 %v1292, %v1963
        %v1994 = vmul.f32 %v1293, %v1967
        %v1995 = vmul.f32 %v1294, %v1967
        %v1996 = vmul.f32 %v1295, %v1967
        %v1997 = vmul.f32 %v1296, %v1971
        %v1998 = vmul.f32 %v1297, %v1971
        %v1999 = vmul.f32 %v1298, %v1971
        %v2000 = vmul.f32 %v1299, %v1975
        %v2001 = vmul.f32 %v1300, %v1975
        %v2002 = vmul.f32 %v1301, %v1975
        %v2003 = vmul.f32 %v1302, %v1979
        %v2004 = vmul.f32 %v1303, %v1979
        %v2005 = vmul.f32 %v1304, %v1979
        %v2006 = vmul.f32 %v1305, %v1983
        %v2007 = vmul.f32 %v1306, %v1983
        %v2008 = vmul.f32 %v1307, %v1983
        %2009 = vrot.lane.b32.xlu0 %v732, 17
        %v2010 = vpop.permute.xlu0 %2009
        %2011 = vrot.lane.b32.xlu0 %v736, 17
        %v2012 = vpop.permute.xlu0 %2011
        %vm2013 = vcmask 138240
        %v2014 = vsel %vm2013, %v2010, %v2012
        %v2018 = vmul.f32 %v1985, %v2010
        %v2019 = vmul.f32 %v1986, %v2014
        %v2020 = vmul.f32 %v1987, %v2012
        %v2021 = vmul.f32 %v1988, %v2010
        %v2022 = vmul.f32 %v1989, %v2014
        %v2023 = vmul.f32 %v1990, %v2012
        %v2024 = vmul.f32 %v1991, %v2010
        %v2025 = vmul.f32 %v1992, %v2014
        %v2026 = vmul.f32 %v1993, %v2012
        %v2027 = vmul.f32 %v1994, %v2010
        %v2028 = vmul.f32 %v1995, %v2014
        %v2029 = vmul.f32 %v1996, %v2012
        %v2030 = vmul.f32 %v1997, %v2010
        %v2031 = vmul.f32 %v1998, %v2014
        %v2032 = vmul.f32 %v1999, %v2012
        %v2033 = vmul.f32 %v2000, %v2010
        %v2034 = vmul.f32 %v2001, %v2014
        %v2035 = vmul.f32 %v2002, %v2012
        %v2036 = vmul.f32 %v2003, %v2010
        %v2037 = vmul.f32 %v2004, %v2014
        %v2038 = vmul.f32 %v2005, %v2012
        %v2039 = vmul.f32 %v2006, %v2010
        %v2040 = vmul.f32 %v2007, %v2014
        %v2041 = vmul.f32 %v2008, %v2012
        %2066 = vrot.lane.b32.xlu0 %v2018, 94
        %v2067 = vpop.permute.xlu0 %2066
        %2068 = vrot.lane.b32.xlu0 %v2019, 94
        %v2069 = vpop.permute.xlu0 %2068
        %2070 = vrot.lane.b32.xlu0 %v2020, 94
        %v2071 = vpop.permute.xlu0 %2070
        %2072 = vrot.lane.b32.xlu0 %v2021, 94
        %v2073 = vpop.permute.xlu0 %2072
        %2074 = vrot.lane.b32.xlu0 %v2022, 94
        %v2075 = vpop.permute.xlu0 %2074
        %2076 = vrot.lane.b32.xlu0 %v2023, 94
        %v2077 = vpop.permute.xlu0 %2076
        %2078 = vrot.lane.b32.xlu0 %v2024, 94
        %v2079 = vpop.permute.xlu0 %2078
        %2080 = vrot.lane.b32.xlu0 %v2025, 94
        %v2081 = vpop.permute.xlu0 %2080
        %2082 = vrot.lane.b32.xlu0 %v2026, 94
        %v2083 = vpop.permute.xlu0 %2082
        %2084 = vrot.lane.b32.xlu0 %v2027, 94
        %v2085 = vpop.permute.xlu0 %2084
        %2086 = vrot.lane.b32.xlu0 %v2028, 94
        %v2087 = vpop.permute.xlu0 %2086
        %2088 = vrot.lane.b32.xlu0 %v2029, 94
        %v2089 = vpop.permute.xlu0 %2088
        %2090 = vrot.lane.b32.xlu0 %v2030, 94
        %v2091 = vpop.permute.xlu0 %2090
        %2092 = vrot.lane.b32.xlu0 %v2031, 94
        %v2093 = vpop.permute.xlu0 %2092
        %2094 = vrot.lane.b32.xlu0 %v2032, 94
        %v2095 = vpop.permute.xlu0 %2094
        %2096 = vrot.lane.b32.xlu0 %v2033, 94
        %v2097 = vpop.permute.xlu0 %2096
        %2098 = vrot.lane.b32.xlu0 %v2034, 94
        %v2099 = vpop.permute.xlu0 %2098
        %2100 = vrot.lane.b32.xlu0 %v2035, 94
        %v2101 = vpop.permute.xlu0 %2100
        %2102 = vrot.lane.b32.xlu0 %v2036, 94
        %v2103 = vpop.permute.xlu0 %2102
        %2104 = vrot.lane.b32.xlu0 %v2037, 94
        %v2105 = vpop.permute.xlu0 %2104
        %2106 = vrot.lane.b32.xlu0 %v2038, 94
        %v2107 = vpop.permute.xlu0 %2106
        %2108 = vrot.lane.b32.xlu0 %v2039, 94
        %v2109 = vpop.permute.xlu0 %2108
        %2110 = vrot.lane.b32.xlu0 %v2040, 94
        %v2111 = vpop.permute.xlu0 %2110
        %2112 = vrot.lane.b32.xlu0 %v2041, 94
        %v2113 = vpop.permute.xlu0 %2112
        %vm2114 = vcmask 769024
        %v2115 = vsel %vm2114, %v2067, %v2069
        %v2116 = vsel %vm2114, %v2069, %v2071
        %v2117 = vsel %vm2114, %v2073, %v2075
        %v2118 = vsel %vm2114, %v2075, %v2077
        %v2119 = vsel %vm2114, %v2079, %v2081
        %v2120 = vsel %vm2114, %v2081, %v2083
        %v2121 = vsel %vm2114, %v2085, %v2087
        %v2122 = vsel %vm2114, %v2087, %v2089
        %v2123 = vsel %vm2114, %v2091, %v2093
        %v2124 = vsel %vm2114, %v2093, %v2095
        %v2125 = vsel %vm2114, %v2097, %v2099
        %v2126 = vsel %vm2114, %v2099, %v2101
        %v2127 = vsel %vm2114, %v2103, %v2105
        %v2128 = vsel %vm2114, %v2105, %v2107
        %v2129 = vsel %vm2114, %v2109, %v2111
        %v2130 = vsel %vm2114, %v2111, %v2113
        %v2155 = vadd.f32 %v1929, %v2067
        %v2156 = vadd.f32 %v1930, %v2115
        %v2157 = vadd.f32 %v1931, %v2116
        %v2158 = vadd.f32 %v1932, %v2073
        %v2159 = vadd.f32 %v1933, %v2117
        %v2160 = vadd.f32 %v1934, %v2118
        %v2161 = vadd.f32 %v1935, %v2079
        %v2162 = vadd.f32 %v1936, %v2119
        %v2163 = vadd.f32 %v1937, %v2120
        %v2164 = vadd.f32 %v1938, %v2085
        %v2165 = vadd.f32 %v1939, %v2121
        %v2166 = vadd.f32 %v1940, %v2122
        %v2167 = vadd.f32 %v1941, %v2091
        %v2168 = vadd.f32 %v1942, %v2123
        %v2169 = vadd.f32 %v1943, %v2124
        %v2170 = vadd.f32 %v1944, %v2097
        %v2171 = vadd.f32 %v1945, %v2125
        %v2172 = vadd.f32 %v1946, %v2126
        %v2173 = vadd.f32 %v1947, %v2103
        %v2174 = vadd.f32 %v1948, %v2127
        %v2175 = vadd.f32 %v1949, %v2128
        %v2176 = vadd.f32 %v1950, %v2109
        %v2177 = vadd.f32 %v1951, %v2129
        %v2178 = vadd.f32 %v1952, %v2130
        %v2179 = vmul.f32 %v2155, 0.1
        %v2180 = vmul.f32 %v2156, 0.1
        %v2181 = vmul.f32 %v2157, 0.1
        %v2182 = vmul.f32 %v2158, 0.1
        %v2183 = vmul.f32 %v2159, 0.1
        %v2184 = vmul.f32 %v2160, 0.1
        %v2185 = vmul.f32 %v2161, 0.1
        %v2186 = vmul.f32 %v2162, 0.1
        %v2187 = vmul.f32 %v2163, 0.1
        %v2188 = vmul.f32 %v2164, 0.1
        %v2189 = vmul.f32 %v2165, 0.1
        %v2190 = vmul.f32 %v2166, 0.1
        %v2191 = vmul.f32 %v2167, 0.1
        %v2192 = vmul.f32 %v2168, 0.1
        %v2193 = vmul.f32 %v2169, 0.1
        %v2194 = vmul.f32 %v2170, 0.1
        %v2195 = vmul.f32 %v2171, 0.1
        %v2196 = vmul.f32 %v2172, 0.1
        %v2197 = vmul.f32 %v2173, 0.1
        %v2198 = vmul.f32 %v2174, 0.1
        %v2199 = vmul.f32 %v2175, 0.1
        %v2200 = vmul.f32 %v2176, 0.1
        %v2201 = vmul.f32 %v2177, 0.1
        %v2202 = vmul.f32 %v2178, 0.1
        %v2203 = vmax.f32 %v2155, %v2179
        %v2204 = vmax.f32 %v2156, %v2180
        %v2205 = vmax.f32 %v2157, %v2181
        %v2206 = vmax.f32 %v2158, %v2182
        %v2207 = vmax.f32 %v2159, %v2183
        %v2208 = vmax.f32 %v2160, %v2184
        %v2209 = vmax.f32 %v2161, %v2185
        %v2210 = vmax.f32 %v2162, %v2186
        %v2211 = vmax.f32 %v2163, %v2187
        %v2212 = vmax.f32 %v2164, %v2188
        %v2213 = vmax.f32 %v2165, %v2189
        %v2214 = vmax.f32 %v2166, %v2190
        %v2215 = vmax.f32 %v2167, %v2191
        %v2216 = vmax.f32 %v2168, %v2192
        %v2217 = vmax.f32 %v2169, %v2193
        %v2218 = vmax.f32 %v2170, %v2194
        %v2219 = vmax.f32 %v2171, %v2195
        %v2220 = vmax.f32 %v2172, %v2196
        %v2221 = vmax.f32 %v2173, %v2197
        %v2222 = vmax.f32 %v2174, %v2198
        %v2223 = vmax.f32 %v2175, %v2199
        %v2224 = vmax.f32 %v2176, %v2200
        %v2225 = vmax.f32 %v2177, %v2201
        %v2226 = vmax.f32 %v2178, %v2202
        %v2227 = vld [vmem:[%s2] sm:$0xff]
        %v2228 = vld [vmem:[%s2 + $0x8] sm:$0xff]
        %v2229 = vld [vmem:[%s2 + $0x10] sm:$0xff]
        %v2230 = vld [vmem:[%s2 + $0x18] sm:$0xff]
        %v2231 = vld [vmem:[%s2 + $0x20] sm:$0xff]
        %v2232 = vld [vmem:[%s2 + $0x28] sm:$0xff]
        %v2233 = vld [vmem:[%s2 + $0x30] sm:$0xff]
        %v2234 = vld [vmem:[%s2 + $0x38] sm:$0xff]
        %v2235 = vld [vmem:[%s3] sm:$0xff]
        %v2236 = vld [vmem:[%s3 + $0x8] sm:$0xff]
        %v2237 = vld [vmem:[%s3 + $0x10] sm:$0xff]
        %v2238 = vld [vmem:[%s3 + $0x18] sm:$0xff]
        %v2239 = vld [vmem:[%s3 + $0x20] sm:$0xff]
        %v2240 = vld [vmem:[%s3 + $0x28] sm:$0xff]
        %v2241 = vld [vmem:[%s3 + $0x30] sm:$0xff]
        %v2242 = vld [vmem:[%s3 + $0x38] sm:$0xff]
        %2244 = vset.pattern.permute.xlu0 0
        %2245 = vperm.xlu0 %2244, %v2235
        %v2246 = vpop.permute.xlu0 %2245
        %2249 = vset.pattern.permute.xlu0 0
        %2250 = vperm.xlu0 %2249, %v2236
        %v2251 = vpop.permute.xlu0 %2250
        %2254 = vset.pattern.permute.xlu0 0
        %2255 = vperm.xlu0 %2254, %v2237
        %v2256 = vpop.permute.xlu0 %2255
        %2259 = vset.pattern.permute.xlu0 0
        %2260 = vperm.xlu0 %2259, %v2238
        %v2261 = vpop.permute.xlu0 %2260
        %2264 = vset.pattern.permute.xlu0 0
        %2265 = vperm.xlu0 %2264, %v2239
        %v2266 = vpop.permute.xlu0 %2265
        %2269 = vset.pattern.permute.xlu0 0
        %2270 = vperm.xlu0 %2269, %v2240
        %v2271 = vpop.permute.xlu0 %2270
        %2274 = vset.pattern.permute.xlu0 0
        %2275 = vperm.xlu0 %2274, %v2241
        %v2276 = vpop.permute.xlu0 %2275
        %2279 = vset.pattern.permute.xlu0 0
        %2280 = vperm.xlu0 %2279, %v2242
        %v2281 = vpop.permute.xlu0 %2280
        %2307 = vrot.lane.b32.xlu0 %v2203, 17
        %v2308 = vpop.permute.xlu0 %2307
        %2309 = vrot.lane.b32.xlu0 %v2204, 17
        %v2310 = vpop.permute.xlu0 %2309
        %2311 = vrot.lane.b32.xlu0 %v2205, 17
        %v2312 = vpop.permute.xlu0 %2311
        %2313 = vrot.lane.b32.xlu0 %v2206, 17
        %v2314 = vpop.permute.xlu0 %2313
        %2315 = vrot.lane.b32.xlu0 %v2207, 17
        %v2316 = vpop.permute.xlu0 %2315
        %2317 = vrot.lane.b32.xlu0 %v2208, 17
        %v2318 = vpop.permute.xlu0 %2317
        %2319 = vrot.lane.b32.xlu0 %v2209, 17
        %v2320 = vpop.permute.xlu0 %2319
        %2321 = vrot.lane.b32.xlu0 %v2210, 17
        %v2322 = vpop.permute.xlu0 %2321
        %2323 = vrot.lane.b32.xlu0 %v2211, 17
        %v2324 = vpop.permute.xlu0 %2323
        %2325 = vrot.lane.b32.xlu0 %v2212, 17
        %v2326 = vpop.permute.xlu0 %2325
        %2327 = vrot.lane.b32.xlu0 %v2213, 17
        %v2328 = vpop.permute.xlu0 %2327
        %2329 = vrot.lane.b32.xlu0 %v2214, 17
        %v2330 = vpop.permute.xlu0 %2329
        %2331 = vrot.lane.b32.xlu0 %v2215, 17
        %v2332 = vpop.permute.xlu0 %2331
        %2333 = vrot.lane.b32.xlu0 %v2216, 17
        %v2334 = vpop.permute.xlu0 %2333
        %2335 = vrot.lane.b32.xlu0 %v2217, 17
        %v2336 = vpop.permute.xlu0 %2335
        %2337 = vrot.lane.b32.xlu0 %v2218, 17
        %v2338 = vpop.permute.xlu0 %2337
        %2339 = vrot.lane.b32.xlu0 %v2219, 17
        %v2340 = vpop.permute.xlu0 %2339
        %2341 = vrot.lane.b32.xlu0 %v2220, 17
        %v2342 = vpop.permute.xlu0 %2341
        %2343 = vrot.lane.b32.xlu0 %v2221, 17
        %v2344 = vpop.permute.xlu0 %2343
        %2345 = vrot.lane.b32.xlu0 %v2222, 17
        %v2346 = vpop.permute.xlu0 %2345
        %2347 = vrot.lane.b32.xlu0 %v2223, 17
        %v2348 = vpop.permute.xlu0 %2347
        %2349 = vrot.lane.b32.xlu0 %v2224, 17
        %v2350 = vpop.permute.xlu0 %2349
        %2351 = vrot.lane.b32.xlu0 %v2225, 17
        %v2352 = vpop.permute.xlu0 %2351
        %2353 = vrot.lane.b32.xlu0 %v2226, 17
        %v2354 = vpop.permute.xlu0 %2353
        %v2355 = vsel %vm2013, %v2308, %v2310
        %v2356 = vsel %vm2013, %v2310, %v2312
        %v2357 = vsel %vm2013, %v2314, %v2316
        %v2358 = vsel %vm2013, %v2316, %v2318
        %v2359 = vsel %vm2013, %v2320, %v2322
        %v2360 = vsel %vm2013, %v2322, %v2324
        %v2361 = vsel %vm2013, %v2326, %v2328
        %v2362 = vsel %vm2013, %v2328, %v2330
        %v2363 = vsel %vm2013, %v2332, %v2334
        %v2364 = vsel %vm2013, %v2334, %v2336
        %v2365 = vsel %vm2013, %v2338, %v2340
        %v2366 = vsel %vm2013, %v2340, %v2342
        %v2367 = vsel %vm2013, %v2344, %v2346
        %v2368 = vsel %vm2013, %v2346, %v2348
        %v2369 = vsel %vm2013, %v2350, %v2352
        %v2370 = vsel %vm2013, %v2352, %v2354
        %vm2387 = vcmask 523264
        %v2389 = vsel %vm2387, %v2227, 0
        %v2392 = vsel %vm2387, %v2228, 0
        %v2395 = vsel %vm2387, %v2229, 0
        %v2398 = vsel %vm2387, %v2230, 0
        %v2401 = vsel %vm2387, %v2231, 0
        %v2404 = vsel %vm2387, %v2232, 0
        %v2407 = vsel %vm2387, %v2233, 0
        %v2410 = vsel %vm2387, %v2234, 0
        %2412 = vmatprep.subr.mxu0 %v2356
        %2413 = vmatpush1.msra.mxu0 %v2355
        %2414 = vmatprep.subr.mxu0 %v2358
        %2415 = vmatpush1.msra.mxu0 %v2357
        %2416 = vmatprep.subr.mxu0 %v2360
        %2417 = vmatpush1.msra.mxu0 %v2359
        %2418 = vmatprep.subr.mxu0 %v2362
        %2419 = vmatpush1.msra.mxu0 %v2361
        %2420 = vmatprep.subr.mxu0 %v2364
        %2421 = vmatpush1.msra.mxu0 %v2363
        %2422 = vmatprep.subr.mxu0 %v2366
        %2423 = vmatpush1.msra.mxu0 %v2365
        %2424 = vmatprep.subr.mxu0 %v2368
        %2425 = vmatpush1.msra.mxu0 %v2367
        %2426 = vmatprep.subr.mxu0 %v2370
        %2427 = vmatpush1.msra.mxu0 %v2369
        %2428 = vmatprep.subr.mxu0 0.0
        %2429 = vmatpush1.msra.mxu0 0.0
        %2430 = vmatprep.subr.mxu0 0.0
        %2431 = vmatpush1.msra.mxu0 0.0
        %2432 = vmatprep.subr.mxu0 0.0
        %2433 = vmatpush1.msra.mxu0 0.0
        %2434 = vmatprep.subr.mxu0 0.0
        %2435 = vmatpush1.msra.mxu0 0.0
        %2436 = vmatprep.subr.mxu0 0.0
        %2437 = vmatpush1.msra.mxu0 0.0
        %2438 = vmatprep.subr.mxu0 0.0
        %2439 = vmatpush1.msra.mxu0 0.0
        %2440 = vmatprep.subr.mxu0 0.0
        %2441 = vmatpush1.msra.mxu0 0.0
        %2442 = vmatprep.subr.mxu0 0.0
        %2443 = vmatpush1.msra.mxu0 0.0
        %2444 = vmatprep.subr.mxu0 0.0
        %2445 = vmatpush1.msra.mxu0 0.0
        %2446 = vmatprep.subr.mxu0 0.0
        %2447 = vmatpush1.msra.mxu0 0.0
        %2448 = vmatprep.subr.mxu0 0.0
        %2449 = vmatpush1.msra.mxu0 0.0
        %2450 = vmatprep.subr.mxu0 0.0
        %2451 = vmatpush1.msra.mxu0 0.0
        %2452 = vmatprep.subr.mxu0 0.0
        %2453 = vmatpush1.msra.mxu0 0.0
        %2454 = vmatprep.subr.mxu0 0.0
        %2455 = vmatpush1.msra.mxu0 0.0
        %2456 = vmatprep.subr.mxu0 0.0
        %2457 = vmatpush1.msra.mxu0 0.0
        %2458 = vmatprep.subr.mxu0 0.0
        %2459 = vmatpush1.msra.mxu0 0.0
        %2460 = vmatprep.subr.mxu0 0.0
        %2461 = vmatpush1.msra.mxu0 0.0
        %2462 = vmatprep.subr.mxu0 0.0
        %2463 = vmatpush1.msra.mxu0 0.0
        %2464 = vmatprep.subr.mxu0 0.0
        %2465 = vmatpush1.msra.mxu0 0.0
        %2466 = vmatprep.subr.mxu0 0.0
        %2467 = vmatpush1.msra.mxu0 0.0
        %2468 = vmatprep.subr.mxu0 0.0
        %2469 = vmatpush1.msra.mxu0 0.0
        %2470 = vmatprep.subr.mxu0 0.0
        %2471 = vmatpush1.msra.mxu0 0.0
        %2472 = vmatprep.subr.mxu0 0.0
        %2473 = vmatpush1.msra.mxu0 0.0
        %2474 = vmatprep.subr.mxu0 0.0
        %2475 = vmatpush1.msra.mxu0 0.0
        %2476 = vmatprep.mubr.f32.mxu0 0.0
        %2477 = vmatmul.mubr.f32.gmra.mrb[0].mxu0 %v2389
        %v2478 = vpop.f32.mrb[0].mxu0
        %v2479 = vadd.f32 %v2246, %v2478
        %v2480 = vpop.f32.mrb[0].mxu0
        %v2481 = vadd.f32 %v2246, %v2480
        %2482 = vmatprep.mubr.f32.mxu0 0.0
        %2483 = vmatmul.mubr.f32.gmra.mrb[0].mxu0 %v2392
        %v2484 = vpop.f32.mrb[0].mxu0
        %v2485 = vadd.f32 %v2251, %v2484
        %v2486 = vpop.f32.mrb[0].mxu0
        %v2487 = vadd.f32 %v2251, %v2486
        %2488 = vmatprep.mubr.f32.mxu0 0.0
        %2489 = vmatmul.mubr.f32.gmra.mrb[0].mxu0 %v2395
        %v2490 = vpop.f32.mrb[0].mxu0
        %v2491 = vadd.f32 %v2256, %v2490
        %v2492 = vpop.f32.mrb[0].mxu0
        %v2493 = vadd.f32 %v2256, %v2492
        %2494 = vmatprep.mubr.f32.mxu0 0.0
        %2495 = vmatmul.mubr.f32.gmra.mrb[0].mxu0 %v2398
        %v2496 = vpop.f32.mrb[0].mxu0
        %v2497 = vadd.f32 %v2261, %v2496
        %v2498 = vpop.f32.mrb[0].mxu0
        %v2499 = vadd.f32 %v2261, %v2498
        %2500 = vmatprep.mubr.f32.mxu0 0.0
        %2501 = vmatmul.mubr.f32.gmra.mrb[0].mxu0 %v2401
        %v2502 = vpop.f32.mrb[0].mxu0
        %v2503 = vadd.f32 %v2266, %v2502
        %v2504 = vpop.f32.mrb[0].mxu0
        %v2505 = vadd.f32 %v2266, %v2504
        %2506 = vmatprep.mubr.f32.mxu0 0.0
        %2507 = vmatmul.mubr.f32.gmra.mrb[0].mxu0 %v2404
        %v2508 = vpop.f32.mrb[0].mxu0
        %v2509 = vadd.f32 %v2271, %v2508
        %v2510 = vpop.f32.mrb[0].mxu0
        %v2511 = vadd.f32 %v2271, %v2510
        %2512 = vmatprep.mubr.f32.mxu0 0.0
        %2513 = vmatmul.mubr.f32.gmra.mrb[0].mxu0 %v2407
        %v2514 = vpop.f32.mrb[0].mxu0
        %v2515 = vadd.f32 %v2276, %v2514
        %v2516 = vpop.f32.mrb[0].mxu0
        %v2517 = vadd.f32 %v2276, %v2516
        %2518 = vmatprep.mubr.f32.mxu0 0.0
        %2519 = vmatmul.mubr.f32.gmra.mrb[0].mxu0 %v2410
        %v2520 = vpop.f32.mrb[0].mxu0
        %v2521 = vadd.f32 %v2281, %v2520
        %v2522 = vpop.f32.mrb[0].mxu0
        %v2523 = vadd.f32 %v2281, %v2522
        %2524 = vdwg.mxu0
        %v2525 = vld [vmem:[%s279] sm:$0xff]
        %v2526 = vld [vmem:[%s279 + $0x8] sm:$0xff]
        %v2527 = vld [vmem:[%s279 + $0x10] sm:$0xff]
        %v2528 = vld [vmem:[%s279 + $0x18] sm:$0xff]
        %v2529 = vld [vmem:[%s279 + $0x20] sm:$0xff]
        %v2530 = vld [vmem:[%s279 + $0x28] sm:$0xff]
        %v2531 = vld [vmem:[%s279 + $0x30] sm:$0xff]
        %v2532 = vld [vmem:[%s279 + $0x38] sm:$0xff]
        %v2533 = vld [vmem:[%s279 + $0x40] sm:$0xff]
        %v2534 = vld [vmem:[%s279 + $0x48] sm:$0xff]
        %v2535 = vld [vmem:[%s279 + $0x50] sm:$0xff]
        %v2536 = vld [vmem:[%s279 + $0x58] sm:$0xff]
        %v2537 = vld [vmem:[%s279 + $0x60] sm:$0xff]
        %v2538 = vld [vmem:[%s279 + $0x68] sm:$0xff]
        %v2539 = vld [vmem:[%s279 + $0x70] sm:$0xff]
        %v2540 = vld [vmem:[%s279 + $0x78] sm:$0xff]
        %v2541 = vld [vmem:[%s289] sm:$0xff]
        %v2542 = vld [vmem:[%s289 + $0x8] sm:$0xff]
        %v2543 = vld [vmem:[%s289 + $0x10] sm:$0xff]
        %v2544 = vld [vmem:[%s289 + $0x18] sm:$0xff]
        %v2545 = vld [vmem:[%s289 + $0x20] sm:$0xff]
        %v2546 = vld [vmem:[%s289 + $0x28] sm:$0xff]
        %v2547 = vld [vmem:[%s289 + $0x30] sm:$0xff]
        %v2548 = vld [vmem:[%s289 + $0x38] sm:$0xff]
        %2550 = vset.pattern.permute.xlu0 0
        %2551 = vperm.xlu0 %2550, %v2541
        %v2552 = vpop.permute.xlu0 %2551
        %2555 = vset.pattern.permute.xlu0 0
        %2556 = vperm.xlu0 %2555, %v2542
        %v2557 = vpop.permute.xlu0 %2556
        %2560 = vset.pattern.permute.xlu0 0
        %2561 = vperm.xlu0 %2560, %v2543
        %v2562 = vpop.permute.xlu0 %2561
        %2565 = vset.pattern.permute.xlu0 0
        %2566 = vperm.xlu0 %2565, %v2544
        %v2567 = vpop.permute.xlu0 %2566
        %2570 = vset.pattern.permute.xlu0 0
        %2571 = vperm.xlu0 %2570, %v2545
        %v2572 = vpop.permute.xlu0 %2571
        %2575 = vset.pattern.permute.xlu0 0
        %2576 = vperm.xlu0 %2575, %v2546
        %v2577 = vpop.permute.xlu0 %2576
        %2580 = vset.pattern.permute.xlu0 0
        %2581 = vperm.xlu0 %2580, %v2547
        %v2582 = vpop.permute.xlu0 %2581
        %2585 = vset.pattern.permute.xlu0 0
        %2586 = vperm.xlu0 %2585, %v2548
        %v2587 = vpop.permute.xlu0 %2586
        %v2589 = vmul.f32 %v2525, %v2552
        %v2590 = vmul.f32 %v2526, %v2552
        %v2591 = vmul.f32 %v2527, %v2557
        %v2592 = vmul.f32 %v2528, %v2557
        %v2593 = vmul.f32 %v2529, %v2562
        %v2594 = vmul.f32 %v2530, %v2562
        %v2595 = vmul.f32 %v2531, %v2567
        %v2596 = vmul.f32 %v2532, %v2567
        %v2597 = vmul.f32 %v2533, %v2572
        %v2598 = vmul.f32 %v2534, %v2572
        %v2599 = vmul.f32 %v2535, %v2577
        %v2600 = vmul.f32 %v2536, %v2577
        %v2601 = vmul.f32 %v2537, %v2582
        %v2602 = vmul.f32 %v2538, %v2582
        %v2603 = vmul.f32 %v2539, %v2587
        %v2604 = vmul.f32 %v2540, %v2587
        %v2605 = vadd.f32 %v2479, %v2589
        %v2606 = vadd.f32 %v2481, %v2590
        %v2607 = vadd.f32 %v2485, %v2591
        %v2608 = vadd.f32 %v2487, %v2592
        %v2609 = vadd.f32 %v2491, %v2593
        %v2610 = vadd.f32 %v2493, %v2594
        %v2611 = vadd.f32 %v2497, %v2595
        %v2612 = vadd.f32 %v2499, %v2596
        %v2613 = vadd.f32 %v2503, %v2597
        %v2614 = vadd.f32 %v2505, %v2598
        %v2615 = vadd.f32 %v2509, %v2599
        %v2616 = vadd.f32 %v2511, %v2600
        %v2617 = vadd.f32 %v2515, %v2601
        %v2618 = vadd.f32 %v2517, %v2602
        %v2619 = vadd.f32 %v2521, %v2603
        %v2620 = vadd.f32 %v2523, %v2604
        %2621 = vst [vmem:[%s274] sm:$0xff] %v2605
        %2622 = vst [vmem:[%s274 + $0x8] sm:$0xff] %v2606
        %2623 = vst [vmem:[%s274 + $0x10] sm:$0xff] %v2607
        %2624 = vst [vmem:[%s274 + $0x18] sm:$0xff] %v2608
        %2625 = vst [vmem:[%s274 + $0x20] sm:$0xff] %v2609
        %2626 = vst [vmem:[%s274 + $0x28] sm:$0xff] %v2610
        %2627 = vst [vmem:[%s274 + $0x30] sm:$0xff] %v2611
        %2628 = vst [vmem:[%s274 + $0x38] sm:$0xff] %v2612
        %2629 = vst [vmem:[%s274 + $0x40] sm:$0xff] %v2613
        %2630 = vst [vmem:[%s274 + $0x48] sm:$0xff] %v2614
        %2631 = vst [vmem:[%s274 + $0x50] sm:$0xff] %v2615
        %2632 = vst [vmem:[%s274 + $0x58] sm:$0xff] %v2616
        %2633 = vst [vmem:[%s274 + $0x60] sm:$0xff] %v2617
        %2634 = vst [vmem:[%s274 + $0x68] sm:$0xff] %v2618
        %2635 = vst [vmem:[%s274 + $0x70] sm:$0xff] %v2619
        %2636 = vst [vmem:[%s274 + $0x78] sm:$0xff] %v2620
        %s2637 = sand.u32 %s169, 1
        %s2638 = scalar_lea.sflag [#allocation4], %s2637
        %s2639 = sand.u32 %s169, 1
        %s2640 = smul.addr %s2639, 128
        %s2641 = scalar_lea.vmem [#allocation3], %s2640
        // Predicated region
        $region45: #{tpu_custom_call.1} parent=43 // pred_check
          %p2642 = pneg %p179
        $region46: #{tpu_custom_call.1} parent=43 // pred_check_branch
          %2644 = sbr.rel (%p2642) target = $region48
        $region47: #{tpu_custom_call.1} parent=43 // pred_region
          %s2646 = ssub.s32 2048, 2048
          %2647 = vsyncadd %s2638, %s2646
          %s2648 = smul.addr %s20, 16
          %s2649 = smul.addr %s2648, 128
          %s2650 = scalar_lea.hbm %s6, %s2649
          %s2651 = sshll.u32 %s2641, 4
          %s2652 = int_to_ptr.vmem [resolvable:$true] %s2651
          %2657 = dma.vmem_to_hbm [thread:$0]  %s2652, 2048, %s2650, %s2638, 256, 256, 16
        $region48: #{tpu_custom_call.1} parent=43 // pred_fallthru
          _
      $region44: #{tpu_custom_call.1} parent=5 // pred_fallthru
        _
      %p2658 = scmp.le.s32.totalorder 2, %s15
      // Predicated region
      $region49: #{tpu_custom_call.1} parent=5 // pred_check
        %p2659 = pneg %p2658
      $region50: #{tpu_custom_call.1} parent=5 // pred_check_branch
        %2661 = sbr.rel (%p2659) target = $region52
      $region51: #{tpu_custom_call.1} parent=5 // pred_region
        %s2662 = ssub.s32 %s15, 2
        // Predicated region
        $region53: #{tpu_custom_call.1} parent=51 // pred_check
          %p2663 = pneg %p185
        $region54: #{tpu_custom_call.1} parent=51 // pred_check_branch
          %2665 = sbr.rel (%p2663) target = $region56
        $region55: #{tpu_custom_call.1} parent=51 // pred_region
          %s2666 = sand.u32 %s170, 1
          %s2667 = scalar_lea.sflag [#allocation4], %s2666
          %s2668 = sand.u32 %s170, 1
          %s2669 = smul.addr %s2668, 128
          %s2670 = scalar_lea.vmem [#allocation3], %s2669
          %2671 = dma.done %s2667, 2048
        $region56: #{tpu_custom_call.1} parent=51 // pred_fallthru
          _
      $region52: #{tpu_custom_call.1} parent=5 // pred_fallthru
        _
    $region6: #{tpu_custom_call.1} parent=1 // loop_footer
      %s19 = sadd.s32 1, %s15
    $region7: #{tpu_custom_call.1} parent=1 // loop_footer_branch
      %14 = sbr.rel target = $region3
    $region8: #{tpu_custom_call.1} parent=1 // loop_exit
      _
    %2672 = vsyncpa [#allocation4], 1
    %s2673 = scalar_lea.sflag [#allocation4], 1
    %2674 = vsyncpa %s2673, 1

</llo_original>
